<compile_context>
chip_gen: v7x
topology: tpu7x:2x2x1
jax: 0.10.0
libtpu: 0.0.40
codegen_flags: <defaults>
</compile_context>

<pallas_src>
import functools

import jax
import jax.numpy as jnp
from jax.experimental import pallas as pl
from jax.experimental.pallas import tpu as pltpu

EPS = 1e-5
OUT_W = 8          # output slab lanes: 0:2 canonical_parms, 2:4 pred_logits, rest pad
NUM_PASSES = 5     # 4 BN stat passes (48, 24, 12, 2 features) + 1 output pass
MAX_TILE_N = 1024  # rows per batch tile; ~a few KiB of VMEM per row keeps the kernel
                   # well inside v7x (64 MiB phys) and v5e's 16 MiB scoped default.


def mlp_kernel(
    x_ref,
    w1_ref, g1_ref, be1_ref,
    w2_ref, g2_ref, be2_ref,
    w3_ref, g3_ref, be3_ref,
    w4p_ref, b4p_ref,
    g5p_ref, be5p_ref, w5c0_ref, w5c1_ref, b5_ref,
    out_ref,
    s1, q1, s2, q2, s3, q3, s5, q5,
    *, n_total,
):
    p = pl.program_id(0)   # pass index (slow axis)
    i = pl.program_id(1)   # batch-tile index (fast axis)
    inv_n = jnp.float32(1.0 / n_total)

    # ---- pass-boundary bookkeeping (first tile of a pass only) -------------------
    @pl.when(jnp.logical_and(p == 0, i == 0))
    def _init():
        for s, q in ((s1, q1), (s2, q2), (s3, q3), (s5, q5)):
            s[...] = jnp.zeros_like(s)
            q[...] = jnp.zeros_like(q)

    def finalize(s, q):
        # s held sum, q held sum-sq; convert in place to mean and rsqrt(var + eps).
        # One-pass (E[h^2] - mu^2) variance, accumulated in f32.
        # TODO(synk): switch to centered/two-pass statistics if inputs with
        # |mu| >> sigma ever need tighter variance error.
        mu = s[...] * inv_n
        var = jnp.maximum(q[...] * inv_n - mu * mu, 0.0)
        s[...] = mu
        q[...] = jax.lax.rsqrt(var + EPS)

    @pl.when(jnp.logical_and(p == 1, i == 0))
    def _fin1():
        finalize(s1, q1)

    @pl.when(jnp.logical_and(p == 2, i == 0))
    def _fin2():
        finalize(s2, q2)

    @pl.when(jnp.logical_and(p == 3, i == 0))
    def _fin3():
        finalize(s3, q3)

    @pl.when(jnp.logical_and(p == 4, i == 0))
    def _fin5():
        finalize(s5, q5)

    # ---- per-tile compute ----------------------------------------------------------
    def accumulate(h, s, q):
        s[...] += jnp.sum(h, axis=0, keepdims=True)
        q[...] += jnp.sum(h * h, axis=0, keepdims=True)

    def bn_relu(h, s, q, g_ref, be_ref):
        # s = batch mean, q = rsqrt(var + eps) (already finalized for this layer).
        return jnp.maximum((h - s[...]) * q[...] * g_ref[...] + be_ref[...], 0.0)

    # Pre-BN Linear biases are dropped: a bias added before training-mode BatchNorm
    # cancels exactly against the batch mean.
    def h1():
        return jnp.dot(x_ref[...], w1_ref[...], preferred_element_type=jnp.float32)

    def h2():
        a1 = bn_relu(h1(), s1, q1, g1_ref, be1_ref)
        return jnp.dot(a1.astype(jnp.bfloat16), w2_ref[...],
                       preferred_element_type=jnp.float32)

    def h3():
        a2 = bn_relu(h2(), s2, q2, g2_ref, be2_ref)
        return jnp.dot(a2.astype(jnp.bfloat16), w3_ref[...],
                       preferred_element_type=jnp.float32)

    def canon():
        # w4 is zero-padded to (12, OUT_W) so the matmul lands directly in the output
        # slab layout (lanes 0:2 real, pad lanes exactly 0).
        a3 = bn_relu(h3(), s3, q3, g3_ref, be3_ref)
        return jnp.dot(a3.astype(jnp.bfloat16), w4p_ref[...],
                       preferred_element_type=jnp.float32) + b4p_ref[...]

    @pl.when(p == 0)
    def _p0():
        accumulate(h1(), s1, q1)

    @pl.when(p == 1)
    def _p1():
        accumulate(h2(), s2, q2)

    @pl.when(p == 2)
    def _p2():
        accumulate(h3(), s3, q3)

    @pl.when(p == 3)
    def _p3():
        accumulate(canon(), s5, q5)

    @pl.when(p == 4)
    def _p4():
        c = canon()
        # log_reg_aprx: BN(2) -> ReLU -> Linear(2,2).  Pad lanes stay exactly 0
        # (gamma/beta/w5 pads are 0), so the BN/reduce over the slab is free.
        z = jnp.maximum((c - s5[...]) * q5[...] * g5p_ref[...] + be5p_ref[...], 0.0)
        l0 = jnp.sum(z * w5c0_ref[...], axis=1, keepdims=True) + b5_ref[0, 0]
        l1 = jnp.sum(z * w5c1_ref[...], axis=1, keepdims=True) + b5_ref[0, 1]
        # Compose the slab in-register and issue one full-width store.
        col = jax.lax.broadcasted_iota(jnp.int32, c.shape, 1)
        slab = jnp.where(col == 2, l0, c)
        slab = jnp.where(col == 3, l1, slab)
        out_ref[...] = slab


def _pick_tile_n(n, max_tile):
    if n <= max_tile:
        return n
    t = (max_tile // 16) * 16
    while t >= 16:
        if n % t == 0:
            return t
        t -= 16
    raise ValueError(
        f"batch {n} has no tile size that is a multiple of 16 and <= {max_tile}")
    # TODO(synk): ragged last tile via in-kernel row masking for batches with no
    # suitable divisor.


def mlp_forward(x, params, *, max_tile_n=MAX_TILE_N):
    (w1, b1, g1, be1, w2, b2, g2, be2, w3, b3, g3, be3,
     w4, b4, g5, be5, w5, b5) = params
    del b1, b2, b3  # pre-BN biases cancel exactly in training-mode BatchNorm

    n, d = x.shape
    assert n % 8 == 0, "batch must be a multiple of 8 (f32 sublane tile)"
    tile_n = _pick_tile_n(n, max_tile_n)
    n_tiles = n // tile_n
    grid = (NUM_PASSES, n_tiles)

    # One-time parameter prep: bf16 x and MXU weights, lane-padded tail parameters.
    x_bf = x.astype(jnp.bfloat16)
    w1b = w1.astype(jnp.bfloat16)
    w2b = w2.astype(jnp.bfloat16)
    w3b = w3.astype(jnp.bfloat16)
    w4p = jnp.zeros((w4.shape[0], OUT_W), jnp.bfloat16).at[:, :2].set(
        w4.astype(jnp.bfloat16))
    b4p = jnp.zeros((1, OUT_W), jnp.float32).at[:, :2].set(b4)
    g5p = jnp.zeros((1, OUT_W), jnp.float32).at[:, :2].set(g5)
    be5p = jnp.zeros((1, OUT_W), jnp.float32).at[:, :2].set(be5)
    w5c0 = jnp.zeros((1, OUT_W), jnp.float32).at[0, :2].set(w5[:, 0])
    w5c1 = jnp.zeros((1, OUT_W), jnp.float32).at[0, :2].set(w5[:, 1])

    vmem = pltpu.MemorySpace.VMEM

    def resident(a):  # whole array, VMEM-resident across the whole grid
        return pl.BlockSpec(a.shape, lambda p, i: (0, 0), memory_space=vmem)

    in_specs = [
        pl.BlockSpec((tile_n, d), lambda p, i: (i, 0), memory_space=vmem),  # x tiles
        resident(w1b), resident(g1), resident(be1),
        resident(w2b), resident(g2), resident(be2),
        resident(w3b), resident(g3), resident(be3),
        resident(w4p), resident(b4p),
        resident(g5p), resident(be5p), resident(w5c0), resident(w5c1),
        pl.BlockSpec(memory_space=pltpu.MemorySpace.SMEM),                  # b5 scalars
    ]
    out_specs = pl.BlockSpec((tile_n, OUT_W), lambda p, i: (i, 0), memory_space=vmem)

    # Per-layer BN statistic accumulators (sum, sum-sq -> mean, rstd), persistent
    # across grid iterations.
    stat_shapes = [pltpu.VMEM((1, f), jnp.float32)
                   for f in (48, 48, 24, 24, 12, 12, OUT_W, OUT_W)]

    out = pl.pallas_call(
        functools.partial(mlp_kernel, n_total=n),
        out_shape=jax.ShapeDtypeStruct((n, OUT_W), jnp.float32),
        grid_spec=pltpu.PrefetchScalarGridSpec(
            num_scalar_prefetch=0,
            grid=grid,
            in_specs=in_specs,
            out_specs=out_specs,
            scratch_shapes=stat_shapes,
        ),
        compiler_params=pltpu.CompilerParams(
            # Both axes carry state (pass ordering; cross-tile stat accumulation),
            # so both are "arbitrary".
            # TODO(synk): v7x megacore — split the batch-tile axis across the two
            # TensorCores with per-core partial sums combined in VMEM_SHARED/CMEM
            # before each finalize.
            dimension_semantics=("arbitrary", "arbitrary"),
            vmem_limit_bytes=32 * 1024 * 1024,
        ),
    )(x_bf, w1b, g1, be1, w2b, g2, be2, w3b, g3, be3,
      w4p, b4p, g5p, be5p, w5c0, w5c1, b5)

    return out[:, 0:2], out[:, 2:4]


def init_params(key, input_dim):
    """Deterministic init mirroring the torch module's parameter shapes.

    Linear weights stored as (in, out) so the kernel computes x @ W + b.
    BatchNorm1d: gamma=1, beta=0 (torch default).  Vectors kept 2-D ((1, F)).
    """
    dims = [(input_dim, 48), (48, 24), (24, 12), (12, 2)]
    keys = jax.random.split(key, 2 * len(dims) + 2)
    params = []
    ki = 0
    for (fi, fo) in dims[:3]:
        bound = 1.0 / (fi ** 0.5)
        w = jax.random.uniform(keys[ki], (fi, fo), jnp.float32, -bound, bound); ki += 1
        b = jax.random.uniform(keys[ki], (1, fo), jnp.float32, -bound, bound); ki += 1
        params += [w, b, jnp.ones((1, fo), jnp.float32), jnp.zeros((1, fo), jnp.float32)]
    fi, fo = dims[3]
    bound = 1.0 / (fi ** 0.5)
    w4 = jax.random.uniform(keys[ki], (fi, fo), jnp.float32, -bound, bound); ki += 1
    b4 = jax.random.uniform(keys[ki], (1, fo), jnp.float32, -bound, bound); ki += 1
    params += [w4, b4]
    g5 = jnp.ones((1, 2), jnp.float32)
    be5 = jnp.zeros((1, 2), jnp.float32)
    bound = 1.0 / (2 ** 0.5)
    w5 = jax.random.uniform(keys[ki], (2, 2), jnp.float32, -bound, bound); ki += 1
    b5 = jax.random.uniform(keys[ki], (1, 2), jnp.float32, -bound, bound); ki += 1
    params += [g5, be5, w5, b5]
    return tuple(params)


def reference_forward(x, params):
    """Pure-JAX reference: torch-faithful math (biases included, two-pass variance)
    with the same bf16-at-MXU precision choice as the kernel (so the test validates
    kernel vs bf16 reference, which is the intended precision contract)."""
    (w1, b1, g1, be1, w2, b2, g2, be2, w3, b3, g3, be3,
     w4, b4, g5, be5, w5, b5) = params

    def lin(h, w, b):
        return jnp.dot(h.astype(jnp.bfloat16), w.astype(jnp.bfloat16),
                       preferred_element_type=jnp.float32) + b

    def bn_relu(h, g, be):
        mu = jnp.mean(h, axis=0, keepdims=True)
        var = jnp.mean((h - mu) ** 2, axis=0, keepdims=True)  # biased (training mode)
        return jnp.maximum((h - mu) / jnp.sqrt(var + EPS) * g + be, 0.0)

    h = bn_relu(lin(x, w1, b1), g1, be1)
    h = bn_relu(lin(h, w2, b2), g2, be2)
    h = bn_relu(lin(h, w3, b3), g3, be3)
    canon = lin(h, w4, b4)
    z = bn_relu(canon, g5, be5)
    logits = z[:, 0:1] * w5[0:1, :] + z[:, 1:2] * w5[1:2, :] + b5  # 2x2 in f32
    return canon, logits


if __name__ == "__main__":
    key = jax.random.PRNGKey(0)
    kx, kp = jax.random.split(key)

    input_dim = 16
    params = init_params(kp, input_dim)

    # Small single-tile case: grid = (5, 1).
    x = jax.random.normal(kx, (8, input_dim), jnp.float32)
    canon, logits = mlp_forward(x, params)
    jax.block_until_ready((canon, logits))
    canon_ref, logits_ref = reference_forward(x, params)
    assert canon.shape == (8, 2) and logits.shape == (8, 2)
    assert jnp.allclose(canon, canon_ref, atol=1e-3, rtol=1e-3), \
        float(jnp.max(jnp.abs(canon - canon_ref)))
    assert jnp.allclose(logits, logits_ref, atol=1e-3, rtol=1e-3), \
        float(jnp.max(jnp.abs(logits - logits_ref)))

    # Multi-tile case exercising cross-tile BN stat accumulation: grid = (5, 4).
    x_big = jax.random.normal(jax.random.PRNGKey(1), (64, input_dim), jnp.float32)
    canon2, logits2 = mlp_forward(x_big, params, max_tile_n=16)
    jax.block_until_ready((canon2, logits2))
    canon2_ref, logits2_ref = reference_forward(x_big, params)
    assert jnp.allclose(canon2, canon2_ref, atol=1e-3, rtol=1e-3), \
        float(jnp.max(jnp.abs(canon2 - canon2_ref)))
    assert jnp.allclose(logits2, logits2_ref, atol=1e-3, rtol=1e-3), \
        float(jnp.max(jnp.abs(logits2 - logits2_ref)))

    print("KERNEL_OK")
</pallas_src>

<mosaic_0001>
module attributes {stable_mosaic.version = 11 : i64} {
  func.func @mlp_kernel(%arg0: i32, %arg1: i32, %arg2: memref<8x16xbf16, #tpu.memory_space<vmem>>, %arg3: memref<16x48xbf16, #tpu.memory_space<vmem>>, %arg4: memref<1x48xf32, #tpu.memory_space<vmem>>, %arg5: memref<1x48xf32, #tpu.memory_space<vmem>>, %arg6: memref<48x24xbf16, #tpu.memory_space<vmem>>, %arg7: memref<1x24xf32, #tpu.memory_space<vmem>>, %arg8: memref<1x24xf32, #tpu.memory_space<vmem>>, %arg9: memref<24x12xbf16, #tpu.memory_space<vmem>>, %arg10: memref<1x12xf32, #tpu.memory_space<vmem>>, %arg11: memref<1x12xf32, #tpu.memory_space<vmem>>, %arg12: memref<12x8xbf16, #tpu.memory_space<vmem>>, %arg13: memref<1x8xf32, #tpu.memory_space<vmem>>, %arg14: memref<1x8xf32, #tpu.memory_space<vmem>>, %arg15: memref<1x8xf32, #tpu.memory_space<vmem>>, %arg16: memref<1x8xf32, #tpu.memory_space<vmem>>, %arg17: memref<1x8xf32, #tpu.memory_space<vmem>>, %arg18: memref<1x2xf32, #tpu.memory_space<smem>>, %arg19: memref<8x8xf32, #tpu.memory_space<vmem>>, %arg20: memref<1x48xf32, #tpu.memory_space<vmem>>, %arg21: memref<1x48xf32, #tpu.memory_space<vmem>>, %arg22: memref<1x24xf32, #tpu.memory_space<vmem>>, %arg23: memref<1x24xf32, #tpu.memory_space<vmem>>, %arg24: memref<1x12xf32, #tpu.memory_space<vmem>>, %arg25: memref<1x12xf32, #tpu.memory_space<vmem>>, %arg26: memref<1x8xf32, #tpu.memory_space<vmem>>, %arg27: memref<1x8xf32, #tpu.memory_space<vmem>>) attributes {dimension_semantics = [#tpu.dimension_semantics<arbitrary>, #tpu.dimension_semantics<arbitrary>], iteration_bounds = array<i64: 5, 1>, scalar_prefetch = 0 : i64, scratch_operands = 8 : i64, tpu.core_type = #tpu.core_type<tc>, window_params = [{transform_indices = @transform_0, window_bounds = array<i64: 8, 16>}, {pipeline_mode = #tpu.pipeline_mode<synchronous>, transform_indices = @transform_1, window_bounds = array<i64: 16, 48>}, {pipeline_mode = #tpu.pipeline_mode<synchronous>, transform_indices = @transform_2, window_bounds = array<i64: 1, 48>}, {pipeline_mode = #tpu.pipeline_mode<synchronous>, transform_indices = @transform_3, window_bounds = array<i64: 1, 48>}, {pipeline_mode = #tpu.pipeline_mode<synchronous>, transform_indices = @transform_4, window_bounds = array<i64: 48, 24>}, {pipeline_mode = #tpu.pipeline_mode<synchronous>, transform_indices = @transform_5, window_bounds = array<i64: 1, 24>}, {pipeline_mode = #tpu.pipeline_mode<synchronous>, transform_indices = @transform_6, window_bounds = array<i64: 1, 24>}, {pipeline_mode = #tpu.pipeline_mode<synchronous>, transform_indices = @transform_7, window_bounds = array<i64: 24, 12>}, {pipeline_mode = #tpu.pipeline_mode<synchronous>, transform_indices = @transform_8, window_bounds = array<i64: 1, 12>}, {pipeline_mode = #tpu.pipeline_mode<synchronous>, transform_indices = @transform_9, window_bounds = array<i64: 1, 12>}, {pipeline_mode = #tpu.pipeline_mode<synchronous>, transform_indices = @transform_10, window_bounds = array<i64: 12, 8>}, {pipeline_mode = #tpu.pipeline_mode<synchronous>, transform_indices = @transform_11, window_bounds = array<i64: 1, 8>}, {pipeline_mode = #tpu.pipeline_mode<synchronous>, transform_indices = @transform_12, window_bounds = array<i64: 1, 8>}, {pipeline_mode = #tpu.pipeline_mode<synchronous>, transform_indices = @transform_13, window_bounds = array<i64: 1, 8>}, {pipeline_mode = #tpu.pipeline_mode<synchronous>, transform_indices = @transform_14, window_bounds = array<i64: 1, 8>}, {pipeline_mode = #tpu.pipeline_mode<synchronous>, transform_indices = @transform_15, window_bounds = array<i64: 1, 8>}, {transform_indices = @transform_16, window_bounds = array<i64: 1, 2>}, {transform_indices = @transform_17, window_bounds = array<i64: 8, 8>}]} {
    %c0_i32 = arith.constant 0 : i32
    %0 = arith.cmpi eq, %arg0, %c0_i32 : i32
    %c0_i32_0 = arith.constant 0 : i32
    %1 = arith.cmpi eq, %arg1, %c0_i32_0 : i32
    %2 = arith.andi %0, %1 : i1
    %3 = arith.extui %2 : i1 to i32
    %c0_i32_1 = arith.constant 0 : i32
    %4 = arith.cmpi ne, %3, %c0_i32_1 : i32
    scf.if %4 {
      %cst_23 = arith.constant 0.000000e+00 : f32
      %40 = vector.broadcast %cst_23 : f32 to vector<1x48xf32>
      %c0 = arith.constant 0 : index
      %c0_24 = arith.constant 0 : index
      %41 = vector.load %arg20[%c0, %c0_24] : memref<1x48xf32, #tpu.memory_space<vmem>>, vector<1x48xf32>
      tpu.vector_store %arg20[%c0, %c0_24], %40 {strides = array<i32>} : memref<1x48xf32, #tpu.memory_space<vmem>>, vector<1x48xf32>,
      %cst_25 = arith.constant 0.000000e+00 : f32
      %42 = vector.broadcast %cst_25 : f32 to vector<1x48xf32>
      %c0_26 = arith.constant 0 : index
      %c0_27 = arith.constant 0 : index
      %43 = vector.load %arg21[%c0_26, %c0_27] : memref<1x48xf32, #tpu.memory_space<vmem>>, vector<1x48xf32>
      tpu.vector_store %arg21[%c0_26, %c0_27], %42 {strides = array<i32>} : memref<1x48xf32, #tpu.memory_space<vmem>>, vector<1x48xf32>,
      %cst_28 = arith.constant 0.000000e+00 : f32
      %44 = vector.broadcast %cst_28 : f32 to vector<1x24xf32>
      %c0_29 = arith.constant 0 : index
      %c0_30 = arith.constant 0 : index
      %45 = vector.load %arg22[%c0_29, %c0_30] : memref<1x24xf32, #tpu.memory_space<vmem>>, vector<1x24xf32>
      tpu.vector_store %arg22[%c0_29, %c0_30], %44 {strides = array<i32>} : memref<1x24xf32, #tpu.memory_space<vmem>>, vector<1x24xf32>,
      %cst_31 = arith.constant 0.000000e+00 : f32
      %46 = vector.broadcast %cst_31 : f32 to vector<1x24xf32>
      %c0_32 = arith.constant 0 : index
      %c0_33 = arith.constant 0 : index
      %47 = vector.load %arg23[%c0_32, %c0_33] : memref<1x24xf32, #tpu.memory_space<vmem>>, vector<1x24xf32>
      tpu.vector_store %arg23[%c0_32, %c0_33], %46 {strides = array<i32>} : memref<1x24xf32, #tpu.memory_space<vmem>>, vector<1x24xf32>,
      %cst_34 = arith.constant 0.000000e+00 : f32
      %48 = vector.broadcast %cst_34 : f32 to vector<1x12xf32>
      %c0_35 = arith.constant 0 : index
      %c0_36 = arith.constant 0 : index
      %49 = vector.load %arg24[%c0_35, %c0_36] : memref<1x12xf32, #tpu.memory_space<vmem>>, vector<1x12xf32>
      tpu.vector_store %arg24[%c0_35, %c0_36], %48 {strides = array<i32>} : memref<1x12xf32, #tpu.memory_space<vmem>>, vector<1x12xf32>,
      %cst_37 = arith.constant 0.000000e+00 : f32
      %50 = vector.broadcast %cst_37 : f32 to vector<1x12xf32>
      %c0_38 = arith.constant 0 : index
      %c0_39 = arith.constant 0 : index
      %51 = vector.load %arg25[%c0_38, %c0_39] : memref<1x12xf32, #tpu.memory_space<vmem>>, vector<1x12xf32>
      tpu.vector_store %arg25[%c0_38, %c0_39], %50 {strides = array<i32>} : memref<1x12xf32, #tpu.memory_space<vmem>>, vector<1x12xf32>,
      %cst_40 = arith.constant 0.000000e+00 : f32
      %52 = vector.broadcast %cst_40 : f32 to vector<1x8xf32>
      %c0_41 = arith.constant 0 : index
      %c0_42 = arith.constant 0 : index
      %53 = vector.load %arg26[%c0_41, %c0_42] : memref<1x8xf32, #tpu.memory_space<vmem>>, vector<1x8xf32>
      tpu.vector_store %arg26[%c0_41, %c0_42], %52 {strides = array<i32>} : memref<1x8xf32, #tpu.memory_space<vmem>>, vector<1x8xf32>,
      %cst_43 = arith.constant 0.000000e+00 : f32
      %54 = vector.broadcast %cst_43 : f32 to vector<1x8xf32>
      %c0_44 = arith.constant 0 : index
      %c0_45 = arith.constant 0 : index
      %55 = vector.load %arg27[%c0_44, %c0_45] : memref<1x8xf32, #tpu.memory_space<vmem>>, vector<1x8xf32>
      tpu.vector_store %arg27[%c0_44, %c0_45], %54 {strides = array<i32>} : memref<1x8xf32, #tpu.memory_space<vmem>>, vector<1x8xf32>,
    } else {
    }
    %c1_i32 = arith.constant 1 : i32
    %5 = arith.cmpi eq, %arg0, %c1_i32 : i32
    %c0_i32_2 = arith.constant 0 : i32
    %6 = arith.cmpi eq, %arg1, %c0_i32_2 : i32
    %7 = arith.andi %5, %6 : i1
    %8 = arith.extui %7 : i1 to i32
    %cst = arith.constant 1.250000e-01 : f32
    %c0_i32_3 = arith.constant 0 : i32
    %9 = arith.cmpi ne, %8, %c0_i32_3 : i32
    scf.if %9 {
      %c0 = arith.constant 0 : index
      %c0_23 = arith.constant 0 : index
      %40 = vector.load %arg20[%c0, %c0_23] : memref<1x48xf32, #tpu.memory_space<vmem>>, vector<1x48xf32>
      %41 = vector.broadcast %cst : f32 to vector<1x48xf32>
      %42 = arith.mulf %40, %41 : vector<1x48xf32>
      %c0_24 = arith.constant 0 : index
      %c0_25 = arith.constant 0 : index
      %43 = vector.load %arg21[%c0_24, %c0_25] : memref<1x48xf32, #tpu.memory_space<vmem>>, vector<1x48xf32>
      %44 = vector.broadcast %cst : f32 to vector<1x48xf32>
      %45 = arith.mulf %43, %44 : vector<1x48xf32>
      %46 = arith.mulf %42, %42 : vector<1x48xf32>
      %47 = arith.subf %45, %46 : vector<1x48xf32>
      %cst_26 = arith.constant 0.000000e+00 : f32
      %48 = vector.broadcast %cst_26 : f32 to vector<1x48xf32>
      %49 = arith.maximumf %47, %48 : vector<1x48xf32>
      %c0_27 = arith.constant 0 : index
      %c0_28 = arith.constant 0 : index
      %50 = vector.load %arg20[%c0_27, %c0_28] : memref<1x48xf32, #tpu.memory_space<vmem>>, vector<1x48xf32>
      tpu.vector_store %arg20[%c0_27, %c0_28], %42 {strides = array<i32>} : memref<1x48xf32, #tpu.memory_space<vmem>>, vector<1x48xf32>,
      %cst_29 = arith.constant 9.99999974E-6 : f32
      %51 = vector.broadcast %cst_29 : f32 to vector<1x48xf32>
      %52 = arith.addf %49, %51 : vector<1x48xf32>
      %53 = math.rsqrt %52 : vector<1x48xf32>
      %c0_30 = arith.constant 0 : index
      %c0_31 = arith.constant 0 : index
      %54 = vector.load %arg21[%c0_30, %c0_31] : memref<1x48xf32, #tpu.memory_space<vmem>>, vector<1x48xf32>
      tpu.vector_store %arg21[%c0_30, %c0_31], %53 {strides = array<i32>} : memref<1x48xf32, #tpu.memory_space<vmem>>, vector<1x48xf32>,
    } else {
    }
    %c2_i32 = arith.constant 2 : i32
    %10 = arith.cmpi eq, %arg0, %c2_i32 : i32
    %c0_i32_4 = arith.constant 0 : i32
    %11 = arith.cmpi eq, %arg1, %c0_i32_4 : i32
    %12 = arith.andi %10, %11 : i1
    %13 = arith.extui %12 : i1 to i32
    %cst_5 = arith.constant 1.250000e-01 : f32
    %c0_i32_6 = arith.constant 0 : i32
    %14 = arith.cmpi ne, %13, %c0_i32_6 : i32
    scf.if %14 {
      %c0 = arith.constant 0 : index
      %c0_23 = arith.constant 0 : index
      %40 = vector.load %arg22[%c0, %c0_23] : memref<1x24xf32, #tpu.memory_space<vmem>>, vector<1x24xf32>
      %41 = vector.broadcast %cst_5 : f32 to vector<1x24xf32>
      %42 = arith.mulf %40, %41 : vector<1x24xf32>
      %c0_24 = arith.constant 0 : index
      %c0_25 = arith.constant 0 : index
      %43 = vector.load %arg23[%c0_24, %c0_25] : memref<1x24xf32, #tpu.memory_space<vmem>>, vector<1x24xf32>
      %44 = vector.broadcast %cst_5 : f32 to vector<1x24xf32>
      %45 = arith.mulf %43, %44 : vector<1x24xf32>
      %46 = arith.mulf %42, %42 : vector<1x24xf32>
      %47 = arith.subf %45, %46 : vector<1x24xf32>
      %cst_26 = arith.constant 0.000000e+00 : f32
      %48 = vector.broadcast %cst_26 : f32 to vector<1x24xf32>
      %49 = arith.maximumf %47, %48 : vector<1x24xf32>
      %c0_27 = arith.constant 0 : index
      %c0_28 = arith.constant 0 : index
      %50 = vector.load %arg22[%c0_27, %c0_28] : memref<1x24xf32, #tpu.memory_space<vmem>>, vector<1x24xf32>
      tpu.vector_store %arg22[%c0_27, %c0_28], %42 {strides = array<i32>} : memref<1x24xf32, #tpu.memory_space<vmem>>, vector<1x24xf32>,
      %cst_29 = arith.constant 9.99999974E-6 : f32
      %51 = vector.broadcast %cst_29 : f32 to vector<1x24xf32>
      %52 = arith.addf %49, %51 : vector<1x24xf32>
      %53 = math.rsqrt %52 : vector<1x24xf32>
      %c0_30 = arith.constant 0 : index
      %c0_31 = arith.constant 0 : index
      %54 = vector.load %arg23[%c0_30, %c0_31] : memref<1x24xf32, #tpu.memory_space<vmem>>, vector<1x24xf32>
      tpu.vector_store %arg23[%c0_30, %c0_31], %53 {strides = array<i32>} : memref<1x24xf32, #tpu.memory_space<vmem>>, vector<1x24xf32>,
    } else {
    }
    %c3_i32 = arith.constant 3 : i32
    %15 = arith.cmpi eq, %arg0, %c3_i32 : i32
    %c0_i32_7 = arith.constant 0 : i32
    %16 = arith.cmpi eq, %arg1, %c0_i32_7 : i32
    %17 = arith.andi %15, %16 : i1
    %18 = arith.extui %17 : i1 to i32
    %cst_8 = arith.constant 1.250000e-01 : f32
    %c0_i32_9 = arith.constant 0 : i32
    %19 = arith.cmpi ne, %18, %c0_i32_9 : i32
    scf.if %19 {
      %c0 = arith.constant 0 : index
      %c0_23 = arith.constant 0 : index
      %40 = vector.load %arg24[%c0, %c0_23] : memref<1x12xf32, #tpu.memory_space<vmem>>, vector<1x12xf32>
      %41 = vector.broadcast %cst_8 : f32 to vector<1x12xf32>
      %42 = arith.mulf %40, %41 : vector<1x12xf32>
      %c0_24 = arith.constant 0 : index
      %c0_25 = arith.constant 0 : index
      %43 = vector.load %arg25[%c0_24, %c0_25] : memref<1x12xf32, #tpu.memory_space<vmem>>, vector<1x12xf32>
      %44 = vector.broadcast %cst_8 : f32 to vector<1x12xf32>
      %45 = arith.mulf %43, %44 : vector<1x12xf32>
      %46 = arith.mulf %42, %42 : vector<1x12xf32>
      %47 = arith.subf %45, %46 : vector<1x12xf32>
      %cst_26 = arith.constant 0.000000e+00 : f32
      %48 = vector.broadcast %cst_26 : f32 to vector<1x12xf32>
      %49 = arith.maximumf %47, %48 : vector<1x12xf32>
      %c0_27 = arith.constant 0 : index
      %c0_28 = arith.constant 0 : index
      %50 = vector.load %arg24[%c0_27, %c0_28] : memref<1x12xf32, #tpu.memory_space<vmem>>, vector<1x12xf32>
      tpu.vector_store %arg24[%c0_27, %c0_28], %42 {strides = array<i32>} : memref<1x12xf32, #tpu.memory_space<vmem>>, vector<1x12xf32>,
      %cst_29 = arith.constant 9.99999974E-6 : f32
      %51 = vector.broadcast %cst_29 : f32 to vector<1x12xf32>
      %52 = arith.addf %49, %51 : vector<1x12xf32>
      %53 = math.rsqrt %52 : vector<1x12xf32>
      %c0_30 = arith.constant 0 : index
      %c0_31 = arith.constant 0 : index
      %54 = vector.load %arg25[%c0_30, %c0_31] : memref<1x12xf32, #tpu.memory_space<vmem>>, vector<1x12xf32>
      tpu.vector_store %arg25[%c0_30, %c0_31], %53 {strides = array<i32>} : memref<1x12xf32, #tpu.memory_space<vmem>>, vector<1x12xf32>,
    } else {
    }
    %c4_i32 = arith.constant 4 : i32
    %20 = arith.cmpi eq, %arg0, %c4_i32 : i32
    %c0_i32_10 = arith.constant 0 : i32
    %21 = arith.cmpi eq, %arg1, %c0_i32_10 : i32
    %22 = arith.andi %20, %21 : i1
    %23 = arith.extui %22 : i1 to i32
    %cst_11 = arith.constant 1.250000e-01 : f32
    %c0_i32_12 = arith.constant 0 : i32
    %24 = arith.cmpi ne, %23, %c0_i32_12 : i32
    scf.if %24 {
      %c0 = arith.constant 0 : index
      %c0_23 = arith.constant 0 : index
      %40 = vector.load %arg26[%c0, %c0_23] : memref<1x8xf32, #tpu.memory_space<vmem>>, vector<1x8xf32>
      %41 = vector.broadcast %cst_11 : f32 to vector<1x8xf32>
      %42 = arith.mulf %40, %41 : vector<1x8xf32>
      %c0_24 = arith.constant 0 : index
      %c0_25 = arith.constant 0 : index
      %43 = vector.load %arg27[%c0_24, %c0_25] : memref<1x8xf32, #tpu.memory_space<vmem>>, vector<1x8xf32>
      %44 = vector.broadcast %cst_11 : f32 to vector<1x8xf32>
      %45 = arith.mulf %43, %44 : vector<1x8xf32>
      %46 = arith.mulf %42, %42 : vector<1x8xf32>
      %47 = arith.subf %45, %46 : vector<1x8xf32>
      %cst_26 = arith.constant 0.000000e+00 : f32
      %48 = vector.broadcast %cst_26 : f32 to vector<1x8xf32>
      %49 = arith.maximumf %47, %48 : vector<1x8xf32>
      %c0_27 = arith.constant 0 : index
      %c0_28 = arith.constant 0 : index
      %50 = vector.load %arg26[%c0_27, %c0_28] : memref<1x8xf32, #tpu.memory_space<vmem>>, vector<1x8xf32>
      tpu.vector_store %arg26[%c0_27, %c0_28], %42 {strides = array<i32>} : memref<1x8xf32, #tpu.memory_space<vmem>>, vector<1x8xf32>,
      %cst_29 = arith.constant 9.99999974E-6 : f32
      %51 = vector.broadcast %cst_29 : f32 to vector<1x8xf32>
      %52 = arith.addf %49, %51 : vector<1x8xf32>
      %53 = math.rsqrt %52 : vector<1x8xf32>
      %c0_30 = arith.constant 0 : index
      %c0_31 = arith.constant 0 : index
      %54 = vector.load %arg27[%c0_30, %c0_31] : memref<1x8xf32, #tpu.memory_space<vmem>>, vector<1x8xf32>
      tpu.vector_store %arg27[%c0_30, %c0_31], %53 {strides = array<i32>} : memref<1x8xf32, #tpu.memory_space<vmem>>, vector<1x8xf32>,
    } else {
    }
    %c0_i32_13 = arith.constant 0 : i32
    %25 = arith.cmpi eq, %arg0, %c0_i32_13 : i32
    %26 = arith.extui %25 : i1 to i32
    %c0_i32_14 = arith.constant 0 : i32
    %27 = arith.cmpi ne, %26, %c0_i32_14 : i32
    scf.if %27 {
      %c0 = arith.constant 0 : index
      %c0_23 = arith.constant 0 : index
      %40 = vector.load %arg2[%c0, %c0_23] : memref<8x16xbf16, #tpu.memory_space<vmem>>, vector<8x16xbf16>
      %c0_24 = arith.constant 0 : index
      %c0_25 = arith.constant 0 : index
      %41 = vector.load %arg3[%c0_24, %c0_25] : memref<16x48xbf16, #tpu.memory_space<vmem>>, vector<16x48xbf16>
      %cst_26 = arith.constant dense<0.000000e+00> : vector<8x48xf32>
      %42 = tpu.matmul %40, %41, %cst_26 {dimension_numbers = #tpu.dot_dimension_numbers<[1], [0], [0], [1], [0, 0, 1, 1], [], []>} : vector<8x16xbf16>, vector<16x48xbf16>, vector<8x48xf32> -> vector<8x48xf32>
      %c0_27 = arith.constant 0 : index
      %c0_28 = arith.constant 0 : index
      %43 = vector.load %arg20[%c0_27, %c0_28] : memref<1x48xf32, #tpu.memory_space<vmem>>, vector<1x48xf32>
      %cst_29 = arith.constant dense<0.000000e+00> : vector<48xf32>
      %44 = vector.multi_reduction <add>, %42, %cst_29 [0] : vector<8x48xf32> to vector<48xf32>
      %45 = vector.shape_cast %44 : vector<48xf32> to vector<1x48xf32>
      %46 = arith.addf %43, %45 : vector<1x48xf32>
      %c0_30 = arith.constant 0 : index
      %c0_31 = arith.constant 0 : index
      %47 = vector.load %arg20[%c0_30, %c0_31] : memref<1x48xf32, #tpu.memory_space<vmem>>, vector<1x48xf32>
      tpu.vector_store %arg20[%c0_30, %c0_31], %46 {strides = array<i32>} : memref<1x48xf32, #tpu.memory_space<vmem>>, vector<1x48xf32>,
      %c0_32 = arith.constant 0 : index
      %c0_33 = arith.constant 0 : index
      %48 = vector.load %arg21[%c0_32, %c0_33] : memref<1x48xf32, #tpu.memory_space<vmem>>, vector<1x48xf32>
      %49 = arith.mulf %42, %42 : vector<8x48xf32>
      %cst_34 = arith.constant dense<0.000000e+00> : vector<48xf32>
      %50 = vector.multi_reduction <add>, %49, %cst_34 [0] : vector<8x48xf32> to vector<48xf32>
      %51 = vector.shape_cast %50 : vector<48xf32> to vector<1x48xf32>
      %52 = arith.addf %48, %51 : vector<1x48xf32>
      %c0_35 = arith.constant 0 : index
      %c0_36 = arith.constant 0 : index
      %53 = vector.load %arg21[%c0_35, %c0_36] : memref<1x48xf32, #tpu.memory_space<vmem>>, vector<1x48xf32>
      tpu.vector_store %arg21[%c0_35, %c0_36], %52 {strides = array<i32>} : memref<1x48xf32, #tpu.memory_space<vmem>>, vector<1x48xf32>,
    } else {
    }
    %c1_i32_15 = arith.constant 1 : i32
    %28 = arith.cmpi eq, %arg0, %c1_i32_15 : i32
    %29 = arith.extui %28 : i1 to i32
    %c0_i32_16 = arith.constant 0 : i32
    %30 = arith.cmpi ne, %29, %c0_i32_16 : i32
    scf.if %30 {
      %c0 = arith.constant 0 : index
      %c0_23 = arith.constant 0 : index
      %40 = vector.load %arg2[%c0, %c0_23] : memref<8x16xbf16, #tpu.memory_space<vmem>>, vector<8x16xbf16>
      %c0_24 = arith.constant 0 : index
      %c0_25 = arith.constant 0 : index
      %41 = vector.load %arg3[%c0_24, %c0_25] : memref<16x48xbf16, #tpu.memory_space<vmem>>, vector<16x48xbf16>
      %cst_26 = arith.constant dense<0.000000e+00> : vector<8x48xf32>
      %42 = tpu.matmul %40, %41, %cst_26 {dimension_numbers = #tpu.dot_dimension_numbers<[1], [0], [0], [1], [0, 0, 1, 1], [], []>} : vector<8x16xbf16>, vector<16x48xbf16>, vector<8x48xf32> -> vector<8x48xf32>
      %c0_27 = arith.constant 0 : index
      %c0_28 = arith.constant 0 : index
      %43 = vector.load %arg20[%c0_27, %c0_28] : memref<1x48xf32, #tpu.memory_space<vmem>>, vector<1x48xf32>
      %44 = vector.broadcast %43 : vector<1x48xf32> to vector<8x48xf32>
      %45 = arith.subf %42, %44 : vector<8x48xf32>
      %c0_29 = arith.constant 0 : index
      %c0_30 = arith.constant 0 : index
      %46 = vector.load %arg21[%c0_29, %c0_30] : memref<1x48xf32, #tpu.memory_space<vmem>>, vector<1x48xf32>
      %47 = vector.broadcast %46 : vector<1x48xf32> to vector<8x48xf32>
      %48 = arith.mulf %45, %47 : vector<8x48xf32>
      %c0_31 = arith.constant 0 : index
      %c0_32 = arith.constant 0 : index
      %49 = vector.load %arg4[%c0_31, %c0_32] : memref<1x48xf32, #tpu.memory_space<vmem>>, vector<1x48xf32>
      %50 = vector.broadcast %49 : vector<1x48xf32> to vector<8x48xf32>
      %51 = arith.mulf %48, %50 : vector<8x48xf32>
      %c0_33 = arith.constant 0 : index
      %c0_34 = arith.constant 0 : index
      %52 = vector.load %arg5[%c0_33, %c0_34] : memref<1x48xf32, #tpu.memory_space<vmem>>, vector<1x48xf32>
      %53 = vector.broadcast %52 : vector<1x48xf32> to vector<8x48xf32>
      %54 = arith.addf %51, %53 : vector<8x48xf32>
      %cst_35 = arith.constant 0.000000e+00 : f32
      %55 = vector.broadcast %cst_35 : f32 to vector<8x48xf32>
      %56 = arith.maximumf %54, %55 : vector<8x48xf32>
      %57 = arith.truncf %56 : vector<8x48xf32> to vector<8x48xbf16>
      %c0_36 = arith.constant 0 : index
      %c0_37 = arith.constant 0 : index
      %58 = vector.load %arg6[%c0_36, %c0_37] : memref<48x24xbf16, #tpu.memory_space<vmem>>, vector<48x24xbf16>
      %cst_38 = arith.constant dense<0.000000e+00> : vector<8x24xf32>
      %59 = tpu.matmul %57, %58, %cst_38 {dimension_numbers = #tpu.dot_dimension_numbers<[1], [0], [0], [1], [0, 0, 1, 1], [], []>} : vector<8x48xbf16>, vector<48x24xbf16>, vector<8x24xf32> -> vector<8x24xf32>
      %c0_39 = arith.constant 0 : index
      %c0_40 = arith.constant 0 : index
      %60 = vector.load %arg22[%c0_39, %c0_40] : memref<1x24xf32, #tpu.memory_space<vmem>>, vector<1x24xf32>
      %cst_41 = arith.constant dense<0.000000e+00> : vector<24xf32>
      %61 = vector.multi_reduction <add>, %59, %cst_41 [0] : vector<8x24xf32> to vector<24xf32>
      %62 = vector.shape_cast %61 : vector<24xf32> to vector<1x24xf32>
      %63 = arith.addf %60, %62 : vector<1x24xf32>
      %c0_42 = arith.constant 0 : index
      %c0_43 = arith.constant 0 : index
      %64 = vector.load %arg22[%c0_42, %c0_43] : memref<1x24xf32, #tpu.memory_space<vmem>>, vector<1x24xf32>
      tpu.vector_store %arg22[%c0_42, %c0_43], %63 {strides = array<i32>} : memref<1x24xf32, #tpu.memory_space<vmem>>, vector<1x24xf32>,
      %c0_44 = arith.constant 0 : index
      %c0_45 = arith.constant 0 : index
      %65 = vector.load %arg23[%c0_44, %c0_45] : memref<1x24xf32, #tpu.memory_space<vmem>>, vector<1x24xf32>
      %66 = arith.mulf %59, %59 : vector<8x24xf32>
      %cst_46 = arith.constant dense<0.000000e+00> : vector<24xf32>
      %67 = vector.multi_reduction <add>, %66, %cst_46 [0] : vector<8x24xf32> to vector<24xf32>
      %68 = vector.shape_cast %67 : vector<24xf32> to vector<1x24xf32>
      %69 = arith.addf %65, %68 : vector<1x24xf32>
      %c0_47 = arith.constant 0 : index
      %c0_48 = arith.constant 0 : index
      %70 = vector.load %arg23[%c0_47, %c0_48] : memref<1x24xf32, #tpu.memory_space<vmem>>, vector<1x24xf32>
      tpu.vector_store %arg23[%c0_47, %c0_48], %69 {strides = array<i32>} : memref<1x24xf32, #tpu.memory_space<vmem>>, vector<1x24xf32>,
    } else {
    }
    %c2_i32_17 = arith.constant 2 : i32
    %31 = arith.cmpi eq, %arg0, %c2_i32_17 : i32
    %32 = arith.extui %31 : i1 to i32
    %c0_i32_18 = arith.constant 0 : i32
    %33 = arith.cmpi ne, %32, %c0_i32_18 : i32
    scf.if %33 {
      %c0 = arith.constant 0 : index
      %c0_23 = arith.constant 0 : index
      %40 = vector.load %arg2[%c0, %c0_23] : memref<8x16xbf16, #tpu.memory_space<vmem>>, vector<8x16xbf16>
      %c0_24 = arith.constant 0 : index
      %c0_25 = arith.constant 0 : index
      %41 = vector.load %arg3[%c0_24, %c0_25] : memref<16x48xbf16, #tpu.memory_space<vmem>>, vector<16x48xbf16>
      %cst_26 = arith.constant dense<0.000000e+00> : vector<8x48xf32>
      %42 = tpu.matmul %40, %41, %cst_26 {dimension_numbers = #tpu.dot_dimension_numbers<[1], [0], [0], [1], [0, 0, 1, 1], [], []>} : vector<8x16xbf16>, vector<16x48xbf16>, vector<8x48xf32> -> vector<8x48xf32>
      %c0_27 = arith.constant 0 : index
      %c0_28 = arith.constant 0 : index
      %43 = vector.load %arg20[%c0_27, %c0_28] : memref<1x48xf32, #tpu.memory_space<vmem>>, vector<1x48xf32>
      %44 = vector.broadcast %43 : vector<1x48xf32> to vector<8x48xf32>
      %45 = arith.subf %42, %44 : vector<8x48xf32>
      %c0_29 = arith.constant 0 : index
      %c0_30 = arith.constant 0 : index
      %46 = vector.load %arg21[%c0_29, %c0_30] : memref<1x48xf32, #tpu.memory_space<vmem>>, vector<1x48xf32>
      %47 = vector.broadcast %46 : vector<1x48xf32> to vector<8x48xf32>
      %48 = arith.mulf %45, %47 : vector<8x48xf32>
      %c0_31 = arith.constant 0 : index
      %c0_32 = arith.constant 0 : index
      %49 = vector.load %arg4[%c0_31, %c0_32] : memref<1x48xf32, #tpu.memory_space<vmem>>, vector<1x48xf32>
      %50 = vector.broadcast %49 : vector<1x48xf32> to vector<8x48xf32>
      %51 = arith.mulf %48, %50 : vector<8x48xf32>
      %c0_33 = arith.constant 0 : index
      %c0_34 = arith.constant 0 : index
      %52 = vector.load %arg5[%c0_33, %c0_34] : memref<1x48xf32, #tpu.memory_space<vmem>>, vector<1x48xf32>
      %53 = vector.broadcast %52 : vector<1x48xf32> to vector<8x48xf32>
      %54 = arith.addf %51, %53 : vector<8x48xf32>
      %cst_35 = arith.constant 0.000000e+00 : f32
      %55 = vector.broadcast %cst_35 : f32 to vector<8x48xf32>
      %56 = arith.maximumf %54, %55 : vector<8x48xf32>
      %57 = arith.truncf %56 : vector<8x48xf32> to vector<8x48xbf16>
      %c0_36 = arith.constant 0 : index
      %c0_37 = arith.constant 0 : index
      %58 = vector.load %arg6[%c0_36, %c0_37] : memref<48x24xbf16, #tpu.memory_space<vmem>>, vector<48x24xbf16>
      %cst_38 = arith.constant dense<0.000000e+00> : vector<8x24xf32>
      %59 = tpu.matmul %57, %58, %cst_38 {dimension_numbers = #tpu.dot_dimension_numbers<[1], [0], [0], [1], [0, 0, 1, 1], [], []>} : vector<8x48xbf16>, vector<48x24xbf16>, vector<8x24xf32> -> vector<8x24xf32>
      %c0_39 = arith.constant 0 : index
      %c0_40 = arith.constant 0 : index
      %60 = vector.load %arg22[%c0_39, %c0_40] : memref<1x24xf32, #tpu.memory_space<vmem>>, vector<1x24xf32>
      %61 = vector.broadcast %60 : vector<1x24xf32> to vector<8x24xf32>
      %62 = arith.subf %59, %61 : vector<8x24xf32>
      %c0_41 = arith.constant 0 : index
      %c0_42 = arith.constant 0 : index
      %63 = vector.load %arg23[%c0_41, %c0_42] : memref<1x24xf32, #tpu.memory_space<vmem>>, vector<1x24xf32>
      %64 = vector.broadcast %63 : vector<1x24xf32> to vector<8x24xf32>
      %65 = arith.mulf %62, %64 : vector<8x24xf32>
      %c0_43 = arith.constant 0 : index
      %c0_44 = arith.constant 0 : index
      %66 = vector.load %arg7[%c0_43, %c0_44] : memref<1x24xf32, #tpu.memory_space<vmem>>, vector<1x24xf32>
      %67 = vector.broadcast %66 : vector<1x24xf32> to vector<8x24xf32>
      %68 = arith.mulf %65, %67 : vector<8x24xf32>
      %c0_45 = arith.constant 0 : index
      %c0_46 = arith.constant 0 : index
      %69 = vector.load %arg8[%c0_45, %c0_46] : memref<1x24xf32, #tpu.memory_space<vmem>>, vector<1x24xf32>
      %70 = vector.broadcast %69 : vector<1x24xf32> to vector<8x24xf32>
      %71 = arith.addf %68, %70 : vector<8x24xf32>
      %cst_47 = arith.constant 0.000000e+00 : f32
      %72 = vector.broadcast %cst_47 : f32 to vector<8x24xf32>
      %73 = arith.maximumf %71, %72 : vector<8x24xf32>
      %74 = arith.truncf %73 : vector<8x24xf32> to vector<8x24xbf16>
      %c0_48 = arith.constant 0 : index
      %c0_49 = arith.constant 0 : index
      %75 = vector.load %arg9[%c0_48, %c0_49] : memref<24x12xbf16, #tpu.memory_space<vmem>>, vector<24x12xbf16>
      %cst_50 = arith.constant dense<0.000000e+00> : vector<8x12xf32>
      %76 = tpu.matmul %74, %75, %cst_50 {dimension_numbers = #tpu.dot_dimension_numbers<[1], [0], [0], [1], [0, 0, 1, 1], [], []>} : vector<8x24xbf16>, vector<24x12xbf16>, vector<8x12xf32> -> vector<8x12xf32>
      %c0_51 = arith.constant 0 : index
      %c0_52 = arith.constant 0 : index
      %77 = vector.load %arg24[%c0_51, %c0_52] : memref<1x12xf32, #tpu.memory_space<vmem>>, vector<1x12xf32>
      %cst_53 = arith.constant dense<0.000000e+00> : vector<12xf32>
      %78 = vector.multi_reduction <add>, %76, %cst_53 [0] : vector<8x12xf32> to vector<12xf32>
      %79 = vector.shape_cast %78 : vector<12xf32> to vector<1x12xf32>
      %80 = arith.addf %77, %79 : vector<1x12xf32>
      %c0_54 = arith.constant 0 : index
      %c0_55 = arith.constant 0 : index
      %81 = vector.load %arg24[%c0_54, %c0_55] : memref<1x12xf32, #tpu.memory_space<vmem>>, vector<1x12xf32>
      tpu.vector_store %arg24[%c0_54, %c0_55], %80 {strides = array<i32>} : memref<1x12xf32, #tpu.memory_space<vmem>>, vector<1x12xf32>,
      %c0_56 = arith.constant 0 : index
      %c0_57 = arith.constant 0 : index
      %82 = vector.load %arg25[%c0_56, %c0_57] : memref<1x12xf32, #tpu.memory_space<vmem>>, vector<1x12xf32>
      %83 = arith.mulf %76, %76 : vector<8x12xf32>
      %cst_58 = arith.constant dense<0.000000e+00> : vector<12xf32>
      %84 = vector.multi_reduction <add>, %83, %cst_58 [0] : vector<8x12xf32> to vector<12xf32>
      %85 = vector.shape_cast %84 : vector<12xf32> to vector<1x12xf32>
      %86 = arith.addf %82, %85 : vector<1x12xf32>
      %c0_59 = arith.constant 0 : index
      %c0_60 = arith.constant 0 : index
      %87 = vector.load %arg25[%c0_59, %c0_60] : memref<1x12xf32, #tpu.memory_space<vmem>>, vector<1x12xf32>
      tpu.vector_store %arg25[%c0_59, %c0_60], %86 {strides = array<i32>} : memref<1x12xf32, #tpu.memory_space<vmem>>, vector<1x12xf32>,
    } else {
    }
    %c3_i32_19 = arith.constant 3 : i32
    %34 = arith.cmpi eq, %arg0, %c3_i32_19 : i32
    %35 = arith.extui %34 : i1 to i32
    %c0_i32_20 = arith.constant 0 : i32
    %36 = arith.cmpi ne, %35, %c0_i32_20 : i32
    scf.if %36 {
      %c0 = arith.constant 0 : index
      %c0_23 = arith.constant 0 : index
      %40 = vector.load %arg2[%c0, %c0_23] : memref<8x16xbf16, #tpu.memory_space<vmem>>, vector<8x16xbf16>
      %c0_24 = arith.constant 0 : index
      %c0_25 = arith.constant 0 : index
      %41 = vector.load %arg3[%c0_24, %c0_25] : memref<16x48xbf16, #tpu.memory_space<vmem>>, vector<16x48xbf16>
      %cst_26 = arith.constant dense<0.000000e+00> : vector<8x48xf32>
      %42 = tpu.matmul %40, %41, %cst_26 {dimension_numbers = #tpu.dot_dimension_numbers<[1], [0], [0], [1], [0, 0, 1, 1], [], []>} : vector<8x16xbf16>, vector<16x48xbf16>, vector<8x48xf32> -> vector<8x48xf32>
      %c0_27 = arith.constant 0 : index
      %c0_28 = arith.constant 0 : index
      %43 = vector.load %arg20[%c0_27, %c0_28] : memref<1x48xf32, #tpu.memory_space<vmem>>, vector<1x48xf32>
      %44 = vector.broadcast %43 : vector<1x48xf32> to vector<8x48xf32>
      %45 = arith.subf %42, %44 : vector<8x48xf32>
      %c0_29 = arith.constant 0 : index
      %c0_30 = arith.constant 0 : index
      %46 = vector.load %arg21[%c0_29, %c0_30] : memref<1x48xf32, #tpu.memory_space<vmem>>, vector<1x48xf32>
      %47 = vector.broadcast %46 : vector<1x48xf32> to vector<8x48xf32>
      %48 = arith.mulf %45, %47 : vector<8x48xf32>
      %c0_31 = arith.constant 0 : index
      %c0_32 = arith.constant 0 : index
      %49 = vector.load %arg4[%c0_31, %c0_32] : memref<1x48xf32, #tpu.memory_space<vmem>>, vector<1x48xf32>
      %50 = vector.broadcast %49 : vector<1x48xf32> to vector<8x48xf32>
      %51 = arith.mulf %48, %50 : vector<8x48xf32>
      %c0_33 = arith.constant 0 : index
      %c0_34 = arith.constant 0 : index
      %52 = vector.load %arg5[%c0_33, %c0_34] : memref<1x48xf32, #tpu.memory_space<vmem>>, vector<1x48xf32>
      %53 = vector.broadcast %52 : vector<1x48xf32> to vector<8x48xf32>
      %54 = arith.addf %51, %53 : vector<8x48xf32>
      %cst_35 = arith.constant 0.000000e+00 : f32
      %55 = vector.broadcast %cst_35 : f32 to vector<8x48xf32>
      %56 = arith.maximumf %54, %55 : vector<8x48xf32>
      %57 = arith.truncf %56 : vector<8x48xf32> to vector<8x48xbf16>
      %c0_36 = arith.constant 0 : index
      %c0_37 = arith.constant 0 : index
      %58 = vector.load %arg6[%c0_36, %c0_37] : memref<48x24xbf16, #tpu.memory_space<vmem>>, vector<48x24xbf16>
      %cst_38 = arith.constant dense<0.000000e+00> : vector<8x24xf32>
      %59 = tpu.matmul %57, %58, %cst_38 {dimension_numbers = #tpu.dot_dimension_numbers<[1], [0], [0], [1], [0, 0, 1, 1], [], []>} : vector<8x48xbf16>, vector<48x24xbf16>, vector<8x24xf32> -> vector<8x24xf32>
      %c0_39 = arith.constant 0 : index
      %c0_40 = arith.constant 0 : index
      %60 = vector.load %arg22[%c0_39, %c0_40] : memref<1x24xf32, #tpu.memory_space<vmem>>, vector<1x24xf32>
      %61 = vector.broadcast %60 : vector<1x24xf32> to vector<8x24xf32>
      %62 = arith.subf %59, %61 : vector<8x24xf32>
      %c0_41 = arith.constant 0 : index
      %c0_42 = arith.constant 0 : index
      %63 = vector.load %arg23[%c0_41, %c0_42] : memref<1x24xf32, #tpu.memory_space<vmem>>, vector<1x24xf32>
      %64 = vector.broadcast %63 : vector<1x24xf32> to vector<8x24xf32>
      %65 = arith.mulf %62, %64 : vector<8x24xf32>
      %c0_43 = arith.constant 0 : index
      %c0_44 = arith.constant 0 : index
      %66 = vector.load %arg7[%c0_43, %c0_44] : memref<1x24xf32, #tpu.memory_space<vmem>>, vector<1x24xf32>
      %67 = vector.broadcast %66 : vector<1x24xf32> to vector<8x24xf32>
      %68 = arith.mulf %65, %67 : vector<8x24xf32>
      %c0_45 = arith.constant 0 : index
      %c0_46 = arith.constant 0 : index
      %69 = vector.load %arg8[%c0_45, %c0_46] : memref<1x24xf32, #tpu.memory_space<vmem>>, vector<1x24xf32>
      %70 = vector.broadcast %69 : vector<1x24xf32> to vector<8x24xf32>
      %71 = arith.addf %68, %70 : vector<8x24xf32>
      %cst_47 = arith.constant 0.000000e+00 : f32
      %72 = vector.broadcast %cst_47 : f32 to vector<8x24xf32>
      %73 = arith.maximumf %71, %72 : vector<8x24xf32>
      %74 = arith.truncf %73 : vector<8x24xf32> to vector<8x24xbf16>
      %c0_48 = arith.constant 0 : index
      %c0_49 = arith.constant 0 : index
      %75 = vector.load %arg9[%c0_48, %c0_49] : memref<24x12xbf16, #tpu.memory_space<vmem>>, vector<24x12xbf16>
      %cst_50 = arith.constant dense<0.000000e+00> : vector<8x12xf32>
      %76 = tpu.matmul %74, %75, %cst_50 {dimension_numbers = #tpu.dot_dimension_numbers<[1], [0], [0], [1], [0, 0, 1, 1], [], []>} : vector<8x24xbf16>, vector<24x12xbf16>, vector<8x12xf32> -> vector<8x12xf32>
      %c0_51 = arith.constant 0 : index
      %c0_52 = arith.constant 0 : index
      %77 = vector.load %arg24[%c0_51, %c0_52] : memref<1x12xf32, #tpu.memory_space<vmem>>, vector<1x12xf32>
      %78 = vector.broadcast %77 : vector<1x12xf32> to vector<8x12xf32>
      %79 = arith.subf %76, %78 : vector<8x12xf32>
      %c0_53 = arith.constant 0 : index
      %c0_54 = arith.constant 0 : index
      %80 = vector.load %arg25[%c0_53, %c0_54] : memref<1x12xf32, #tpu.memory_space<vmem>>, vector<1x12xf32>
      %81 = vector.broadcast %80 : vector<1x12xf32> to vector<8x12xf32>
      %82 = arith.mulf %79, %81 : vector<8x12xf32>
      %c0_55 = arith.constant 0 : index
      %c0_56 = arith.constant 0 : index
      %83 = vector.load %arg10[%c0_55, %c0_56] : memref<1x12xf32, #tpu.memory_space<vmem>>, vector<1x12xf32>
      %84 = vector.broadcast %83 : vector<1x12xf32> to vector<8x12xf32>
      %85 = arith.mulf %82, %84 : vector<8x12xf32>
      %c0_57 = arith.constant 0 : index
      %c0_58 = arith.constant 0 : index
      %86 = vector.load %arg11[%c0_57, %c0_58] : memref<1x12xf32, #tpu.memory_space<vmem>>, vector<1x12xf32>
      %87 = vector.broadcast %86 : vector<1x12xf32> to vector<8x12xf32>
      %88 = arith.addf %85, %87 : vector<8x12xf32>
      %cst_59 = arith.constant 0.000000e+00 : f32
      %89 = vector.broadcast %cst_59 : f32 to vector<8x12xf32>
      %90 = arith.maximumf %88, %89 : vector<8x12xf32>
      %91 = arith.truncf %90 : vector<8x12xf32> to vector<8x12xbf16>
      %c0_60 = arith.constant 0 : index
      %c0_61 = arith.constant 0 : index
      %92 = vector.load %arg12[%c0_60, %c0_61] : memref<12x8xbf16, #tpu.memory_space<vmem>>, vector<12x8xbf16>
      %cst_62 = arith.constant dense<0.000000e+00> : vector<8x8xf32>
      %93 = tpu.matmul %91, %92, %cst_62 {dimension_numbers = #tpu.dot_dimension_numbers<[1], [0], [0], [1], [0, 0, 1, 1], [], []>} : vector<8x12xbf16>, vector<12x8xbf16>, vector<8x8xf32> -> vector<8x8xf32>
      %c0_63 = arith.constant 0 : index
      %c0_64 = arith.constant 0 : index
      %94 = vector.load %arg13[%c0_63, %c0_64] : memref<1x8xf32, #tpu.memory_space<vmem>>, vector<1x8xf32>
      %95 = vector.broadcast %94 : vector<1x8xf32> to vector<8x8xf32>
      %96 = arith.addf %93, %95 : vector<8x8xf32>
      %c0_65 = arith.constant 0 : index
      %c0_66 = arith.constant 0 : index
      %97 = vector.load %arg26[%c0_65, %c0_66] : memref<1x8xf32, #tpu.memory_space<vmem>>, vector<1x8xf32>
      %cst_67 = arith.constant dense<0.000000e+00> : vector<8xf32>
      %98 = vector.multi_reduction <add>, %96, %cst_67 [0] : vector<8x8xf32> to vector<8xf32>
      %99 = vector.shape_cast %98 : vector<8xf32> to vector<1x8xf32>
      %100 = arith.addf %97, %99 : vector<1x8xf32>
      %c0_68 = arith.constant 0 : index
      %c0_69 = arith.constant 0 : index
      %101 = vector.load %arg26[%c0_68, %c0_69] : memref<1x8xf32, #tpu.memory_space<vmem>>, vector<1x8xf32>
      tpu.vector_store %arg26[%c0_68, %c0_69], %100 {strides = array<i32>} : memref<1x8xf32, #tpu.memory_space<vmem>>, vector<1x8xf32>,
      %c0_70 = arith.constant 0 : index
      %c0_71 = arith.constant 0 : index
      %102 = vector.load %arg27[%c0_70, %c0_71] : memref<1x8xf32, #tpu.memory_space<vmem>>, vector<1x8xf32>
      %103 = arith.mulf %96, %96 : vector<8x8xf32>
      %cst_72 = arith.constant dense<0.000000e+00> : vector<8xf32>
      %104 = vector.multi_reduction <add>, %103, %cst_72 [0] : vector<8x8xf32> to vector<8xf32>
      %105 = vector.shape_cast %104 : vector<8xf32> to vector<1x8xf32>
      %106 = arith.addf %102, %105 : vector<1x8xf32>
      %c0_73 = arith.constant 0 : index
      %c0_74 = arith.constant 0 : index
      %107 = vector.load %arg27[%c0_73, %c0_74] : memref<1x8xf32, #tpu.memory_space<vmem>>, vector<1x8xf32>
      tpu.vector_store %arg27[%c0_73, %c0_74], %106 {strides = array<i32>} : memref<1x8xf32, #tpu.memory_space<vmem>>, vector<1x8xf32>,
    } else {
    }
    %c4_i32_21 = arith.constant 4 : i32
    %37 = arith.cmpi eq, %arg0, %c4_i32_21 : i32
    %38 = arith.extui %37 : i1 to i32
    %c0_i32_22 = arith.constant 0 : i32
    %39 = arith.cmpi ne, %38, %c0_i32_22 : i32
    scf.if %39 {
      %c0 = arith.constant 0 : index
      %c0_23 = arith.constant 0 : index
      %40 = vector.load %arg2[%c0, %c0_23] : memref<8x16xbf16, #tpu.memory_space<vmem>>, vector<8x16xbf16>
      %c0_24 = arith.constant 0 : index
      %c0_25 = arith.constant 0 : index
      %41 = vector.load %arg3[%c0_24, %c0_25] : memref<16x48xbf16, #tpu.memory_space<vmem>>, vector<16x48xbf16>
      %cst_26 = arith.constant dense<0.000000e+00> : vector<8x48xf32>
      %42 = tpu.matmul %40, %41, %cst_26 {dimension_numbers = #tpu.dot_dimension_numbers<[1], [0], [0], [1], [0, 0, 1, 1], [], []>} : vector<8x16xbf16>, vector<16x48xbf16>, vector<8x48xf32> -> vector<8x48xf32>
      %c0_27 = arith.constant 0 : index
      %c0_28 = arith.constant 0 : index
      %43 = vector.load %arg20[%c0_27, %c0_28] : memref<1x48xf32, #tpu.memory_space<vmem>>, vector<1x48xf32>
      %44 = vector.broadcast %43 : vector<1x48xf32> to vector<8x48xf32>
      %45 = arith.subf %42, %44 : vector<8x48xf32>
      %c0_29 = arith.constant 0 : index
      %c0_30 = arith.constant 0 : index
      %46 = vector.load %arg21[%c0_29, %c0_30] : memref<1x48xf32, #tpu.memory_space<vmem>>, vector<1x48xf32>
      %47 = vector.broadcast %46 : vector<1x48xf32> to vector<8x48xf32>
      %48 = arith.mulf %45, %47 : vector<8x48xf32>
      %c0_31 = arith.constant 0 : index
      %c0_32 = arith.constant 0 : index
      %49 = vector.load %arg4[%c0_31, %c0_32] : memref<1x48xf32, #tpu.memory_space<vmem>>, vector<1x48xf32>
      %50 = vector.broadcast %49 : vector<1x48xf32> to vector<8x48xf32>
      %51 = arith.mulf %48, %50 : vector<8x48xf32>
      %c0_33 = arith.constant 0 : index
      %c0_34 = arith.constant 0 : index
      %52 = vector.load %arg5[%c0_33, %c0_34] : memref<1x48xf32, #tpu.memory_space<vmem>>, vector<1x48xf32>
      %53 = vector.broadcast %52 : vector<1x48xf32> to vector<8x48xf32>
      %54 = arith.addf %51, %53 : vector<8x48xf32>
      %cst_35 = arith.constant 0.000000e+00 : f32
      %55 = vector.broadcast %cst_35 : f32 to vector<8x48xf32>
      %56 = arith.maximumf %54, %55 : vector<8x48xf32>
      %57 = arith.truncf %56 : vector<8x48xf32> to vector<8x48xbf16>
      %c0_36 = arith.constant 0 : index
      %c0_37 = arith.constant 0 : index
      %58 = vector.load %arg6[%c0_36, %c0_37] : memref<48x24xbf16, #tpu.memory_space<vmem>>, vector<48x24xbf16>
      %cst_38 = arith.constant dense<0.000000e+00> : vector<8x24xf32>
      %59 = tpu.matmul %57, %58, %cst_38 {dimension_numbers = #tpu.dot_dimension_numbers<[1], [0], [0], [1], [0, 0, 1, 1], [], []>} : vector<8x48xbf16>, vector<48x24xbf16>, vector<8x24xf32> -> vector<8x24xf32>
      %c0_39 = arith.constant 0 : index
      %c0_40 = arith.constant 0 : index
      %60 = vector.load %arg22[%c0_39, %c0_40] : memref<1x24xf32, #tpu.memory_space<vmem>>, vector<1x24xf32>
      %61 = vector.broadcast %60 : vector<1x24xf32> to vector<8x24xf32>
      %62 = arith.subf %59, %61 : vector<8x24xf32>
      %c0_41 = arith.constant 0 : index
      %c0_42 = arith.constant 0 : index
      %63 = vector.load %arg23[%c0_41, %c0_42] : memref<1x24xf32, #tpu.memory_space<vmem>>, vector<1x24xf32>
      %64 = vector.broadcast %63 : vector<1x24xf32> to vector<8x24xf32>
      %65 = arith.mulf %62, %64 : vector<8x24xf32>
      %c0_43 = arith.constant 0 : index
      %c0_44 = arith.constant 0 : index
      %66 = vector.load %arg7[%c0_43, %c0_44] : memref<1x24xf32, #tpu.memory_space<vmem>>, vector<1x24xf32>
      %67 = vector.broadcast %66 : vector<1x24xf32> to vector<8x24xf32>
      %68 = arith.mulf %65, %67 : vector<8x24xf32>
      %c0_45 = arith.constant 0 : index
      %c0_46 = arith.constant 0 : index
      %69 = vector.load %arg8[%c0_45, %c0_46] : memref<1x24xf32, #tpu.memory_space<vmem>>, vector<1x24xf32>
      %70 = vector.broadcast %69 : vector<1x24xf32> to vector<8x24xf32>
      %71 = arith.addf %68, %70 : vector<8x24xf32>
      %cst_47 = arith.constant 0.000000e+00 : f32
      %72 = vector.broadcast %cst_47 : f32 to vector<8x24xf32>
      %73 = arith.maximumf %71, %72 : vector<8x24xf32>
      %74 = arith.truncf %73 : vector<8x24xf32> to vector<8x24xbf16>
      %c0_48 = arith.constant 0 : index
      %c0_49 = arith.constant 0 : index
      %75 = vector.load %arg9[%c0_48, %c0_49] : memref<24x12xbf16, #tpu.memory_space<vmem>>, vector<24x12xbf16>
      %cst_50 = arith.constant dense<0.000000e+00> : vector<8x12xf32>
      %76 = tpu.matmul %74, %75, %cst_50 {dimension_numbers = #tpu.dot_dimension_numbers<[1], [0], [0], [1], [0, 0, 1, 1], [], []>} : vector<8x24xbf16>, vector<24x12xbf16>, vector<8x12xf32> -> vector<8x12xf32>
      %c0_51 = arith.constant 0 : index
      %c0_52 = arith.constant 0 : index
      %77 = vector.load %arg24[%c0_51, %c0_52] : memref<1x12xf32, #tpu.memory_space<vmem>>, vector<1x12xf32>
      %78 = vector.broadcast %77 : vector<1x12xf32> to vector<8x12xf32>
      %79 = arith.subf %76, %78 : vector<8x12xf32>
      %c0_53 = arith.constant 0 : index
      %c0_54 = arith.constant 0 : index
      %80 = vector.load %arg25[%c0_53, %c0_54] : memref<1x12xf32, #tpu.memory_space<vmem>>, vector<1x12xf32>
      %81 = vector.broadcast %80 : vector<1x12xf32> to vector<8x12xf32>
      %82 = arith.mulf %79, %81 : vector<8x12xf32>
      %c0_55 = arith.constant 0 : index
      %c0_56 = arith.constant 0 : index
      %83 = vector.load %arg10[%c0_55, %c0_56] : memref<1x12xf32, #tpu.memory_space<vmem>>, vector<1x12xf32>
      %84 = vector.broadcast %83 : vector<1x12xf32> to vector<8x12xf32>
      %85 = arith.mulf %82, %84 : vector<8x12xf32>
      %c0_57 = arith.constant 0 : index
      %c0_58 = arith.constant 0 : index
      %86 = vector.load %arg11[%c0_57, %c0_58] : memref<1x12xf32, #tpu.memory_space<vmem>>, vector<1x12xf32>
      %87 = vector.broadcast %86 : vector<1x12xf32> to vector<8x12xf32>
      %88 = arith.addf %85, %87 : vector<8x12xf32>
      %cst_59 = arith.constant 0.000000e+00 : f32
      %89 = vector.broadcast %cst_59 : f32 to vector<8x12xf32>
      %90 = arith.maximumf %88, %89 : vector<8x12xf32>
      %91 = arith.truncf %90 : vector<8x12xf32> to vector<8x12xbf16>
      %c0_60 = arith.constant 0 : index
      %c0_61 = arith.constant 0 : index
      %92 = vector.load %arg12[%c0_60, %c0_61] : memref<12x8xbf16, #tpu.memory_space<vmem>>, vector<12x8xbf16>
      %cst_62 = arith.constant dense<0.000000e+00> : vector<8x8xf32>
      %93 = tpu.matmul %91, %92, %cst_62 {dimension_numbers = #tpu.dot_dimension_numbers<[1], [0], [0], [1], [0, 0, 1, 1], [], []>} : vector<8x12xbf16>, vector<12x8xbf16>, vector<8x8xf32> -> vector<8x8xf32>
      %c0_63 = arith.constant 0 : index
      %c0_64 = arith.constant 0 : index
      %94 = vector.load %arg13[%c0_63, %c0_64] : memref<1x8xf32, #tpu.memory_space<vmem>>, vector<1x8xf32>
      %95 = vector.broadcast %94 : vector<1x8xf32> to vector<8x8xf32>
      %96 = arith.addf %93, %95 : vector<8x8xf32>
      %c0_65 = arith.constant 0 : index
      %c0_66 = arith.constant 0 : index
      %97 = vector.load %arg26[%c0_65, %c0_66] : memref<1x8xf32, #tpu.memory_space<vmem>>, vector<1x8xf32>
      %98 = vector.broadcast %97 : vector<1x8xf32> to vector<8x8xf32>
      %99 = arith.subf %96, %98 : vector<8x8xf32>
      %c0_67 = arith.constant 0 : index
      %c0_68 = arith.constant 0 : index
      %100 = vector.load %arg27[%c0_67, %c0_68] : memref<1x8xf32, #tpu.memory_space<vmem>>, vector<1x8xf32>
      %101 = vector.broadcast %100 : vector<1x8xf32> to vector<8x8xf32>
      %102 = arith.mulf %99, %101 : vector<8x8xf32>
      %c0_69 = arith.constant 0 : index
      %c0_70 = arith.constant 0 : index
      %103 = vector.load %arg14[%c0_69, %c0_70] : memref<1x8xf32, #tpu.memory_space<vmem>>, vector<1x8xf32>
      %104 = vector.broadcast %103 : vector<1x8xf32> to vector<8x8xf32>
      %105 = arith.mulf %102, %104 : vector<8x8xf32>
      %c0_71 = arith.constant 0 : index
      %c0_72 = arith.constant 0 : index
      %106 = vector.load %arg15[%c0_71, %c0_72] : memref<1x8xf32, #tpu.memory_space<vmem>>, vector<1x8xf32>
      %107 = vector.broadcast %106 : vector<1x8xf32> to vector<8x8xf32>
      %108 = arith.addf %105, %107 : vector<8x8xf32>
      %cst_73 = arith.constant 0.000000e+00 : f32
      %109 = vector.broadcast %cst_73 : f32 to vector<8x8xf32>
      %110 = arith.maximumf %108, %109 : vector<8x8xf32>
      %c0_74 = arith.constant 0 : index
      %c0_75 = arith.constant 0 : index
      %111 = vector.load %arg16[%c0_74, %c0_75] : memref<1x8xf32, #tpu.memory_space<vmem>>, vector<1x8xf32>
      %112 = vector.broadcast %111 : vector<1x8xf32> to vector<8x8xf32>
      %113 = arith.mulf %110, %112 : vector<8x8xf32>
      %cst_76 = arith.constant dense<0.000000e+00> : vector<8xf32>
      %114 = vector.multi_reduction <add>, %113, %cst_76 [1] : vector<8x8xf32> to vector<8xf32>
      %115 = vector.shape_cast %114 : vector<8xf32> to vector<8x1xf32>
      %c0_77 = arith.constant 0 : index
      %c0_78 = arith.constant 0 : index
      %116 = memref.load %arg18[%c0_77, %c0_78] : memref<1x2xf32, #tpu.memory_space<smem>>
      %117 = vector.broadcast %116 : f32 to vector<8x1xf32>
      %118 = arith.addf %115, %117 : vector<8x1xf32>
      %c0_79 = arith.constant 0 : index
      %c0_80 = arith.constant 0 : index
      %119 = vector.load %arg17[%c0_79, %c0_80] : memref<1x8xf32, #tpu.memory_space<vmem>>, vector<1x8xf32>
      %120 = vector.broadcast %119 : vector<1x8xf32> to vector<8x8xf32>
      %121 = arith.mulf %110, %120 : vector<8x8xf32>
      %cst_81 = arith.constant dense<0.000000e+00> : vector<8xf32>
      %122 = vector.multi_reduction <add>, %121, %cst_81 [1] : vector<8x8xf32> to vector<8xf32>
      %123 = vector.shape_cast %122 : vector<8xf32> to vector<8x1xf32>
      %c0_82 = arith.constant 0 : index
      %c1 = arith.constant 1 : index
      %124 = memref.load %arg18[%c0_82, %c1] : memref<1x2xf32, #tpu.memory_space<smem>>
      %125 = vector.broadcast %124 : f32 to vector<8x1xf32>
      %126 = arith.addf %123, %125 : vector<8x1xf32>
      %127 = tpu.iota {dimensions = array<i32: 1>} : vector<8x8xi32>
      %c2_i32_83 = arith.constant 2 : i32
      %128 = vector.broadcast %c2_i32_83 : i32 to vector<8x8xi32>
      %129 = arith.cmpi eq, %127, %128 : vector<8x8xi32>
      %130 = vector.shape_cast %118 : vector<8x1xf32> to vector<8x1xf32>
      %131 = vector.broadcast %130 : vector<8x1xf32> to vector<8x8xf32>
      %132 = arith.select %129, %131, %96 : vector<8x8xi1>, vector<8x8xf32>
      %c3_i32_84 = arith.constant 3 : i32
      %133 = vector.broadcast %c3_i32_84 : i32 to vector<8x8xi32>
      %134 = arith.cmpi eq, %127, %133 : vector<8x8xi32>
      %135 = vector.shape_cast %126 : vector<8x1xf32> to vector<8x1xf32>
      %136 = vector.broadcast %135 : vector<8x1xf32> to vector<8x8xf32>
      %137 = arith.select %134, %136, %132 : vector<8x8xi1>, vector<8x8xf32>
      %c0_85 = arith.constant 0 : index
      %c0_86 = arith.constant 0 : index
      %138 = vector.load %arg19[%c0_85, %c0_86] : memref<8x8xf32, #tpu.memory_space<vmem>>, vector<8x8xf32>
      tpu.vector_store %arg19[%c0_85, %c0_86], %137 {strides = array<i32>} : memref<8x8xf32, #tpu.memory_space<vmem>>, vector<8x8xf32>,
    } else {
    }
    return
  }
  func.func @transform_0(%arg0: i32, %arg1: i32) -> (i32, i32) {
    %c0_i32 = arith.constant 0 : i32
    %c0_i32_0 = arith.constant 0 : i32
    return %arg1, %c0_i32 : i32, i32
  }
  func.func @transform_1(%arg0: i32, %arg1: i32) -> (i32, i32) {
    %c0_i32 = arith.constant 0 : i32
    %c0_i32_0 = arith.constant 0 : i32
    %c0_i32_1 = arith.constant 0 : i32
    return %c0_i32, %c0_i32_0 : i32, i32
  }
  func.func @transform_2(%arg0: i32, %arg1: i32) -> (i32, i32) {
    %c0_i32 = arith.constant 0 : i32
    %c0_i32_0 = arith.constant 0 : i32
    %c0_i32_1 = arith.constant 0 : i32
    return %c0_i32, %c0_i32_0 : i32, i32
  }
  func.func @transform_3(%arg0: i32, %arg1: i32) -> (i32, i32) {
    %c0_i32 = arith.constant 0 : i32
    %c0_i32_0 = arith.constant 0 : i32
    %c0_i32_1 = arith.constant 0 : i32
    return %c0_i32, %c0_i32_0 : i32, i32
  }
  func.func @transform_4(%arg0: i32, %arg1: i32) -> (i32, i32) {
    %c0_i32 = arith.constant 0 : i32
    %c0_i32_0 = arith.constant 0 : i32
    %c0_i32_1 = arith.constant 0 : i32
    return %c0_i32, %c0_i32_0 : i32, i32
  }
  func.func @transform_5(%arg0: i32, %arg1: i32) -> (i32, i32) {
    %c0_i32 = arith.constant 0 : i32
    %c0_i32_0 = arith.constant 0 : i32
    %c0_i32_1 = arith.constant 0 : i32
    return %c0_i32, %c0_i32_0 : i32, i32
  }
  func.func @transform_6(%arg0: i32, %arg1: i32) -> (i32, i32) {
    %c0_i32 = arith.constant 0 : i32
    %c0_i32_0 = arith.constant 0 : i32
    %c0_i32_1 = arith.constant 0 : i32
    return %c0_i32, %c0_i32_0 : i32, i32
  }
  func.func @transform_7(%arg0: i32, %arg1: i32) -> (i32, i32) {
    %c0_i32 = arith.constant 0 : i32
    %c0_i32_0 = arith.constant 0 : i32
    %c0_i32_1 = arith.constant 0 : i32
    return %c0_i32, %c0_i32_0 : i32, i32
  }
  func.func @transform_8(%arg0: i32, %arg1: i32) -> (i32, i32) {
    %c0_i32 = arith.constant 0 : i32
    %c0_i32_0 = arith.constant 0 : i32
    %c0_i32_1 = arith.constant 0 : i32
    return %c0_i32, %c0_i32_0 : i32, i32
  }
  func.func @transform_9(%arg0: i32, %arg1: i32) -> (i32, i32) {
    %c0_i32 = arith.constant 0 : i32
    %c0_i32_0 = arith.constant 0 : i32
    %c0_i32_1 = arith.constant 0 : i32
    return %c0_i32, %c0_i32_0 : i32, i32
  }
  func.func @transform_10(%arg0: i32, %arg1: i32) -> (i32, i32) {
    %c0_i32 = arith.constant 0 : i32
    %c0_i32_0 = arith.constant 0 : i32
    %c0_i32_1 = arith.constant 0 : i32
    return %c0_i32, %c0_i32_0 : i32, i32
  }
  func.func @transform_11(%arg0: i32, %arg1: i32) -> (i32, i32) {
    %c0_i32 = arith.constant 0 : i32
    %c0_i32_0 = arith.constant 0 : i32
    %c0_i32_1 = arith.constant 0 : i32
    return %c0_i32, %c0_i32_0 : i32, i32
  }
  func.func @transform_12(%arg0: i32, %arg1: i32) -> (i32, i32) {
    %c0_i32 = arith.constant 0 : i32
    %c0_i32_0 = arith.constant 0 : i32
    %c0_i32_1 = arith.constant 0 : i32
    return %c0_i32, %c0_i32_0 : i32, i32
  }
  func.func @transform_13(%arg0: i32, %arg1: i32) -> (i32, i32) {
    %c0_i32 = arith.constant 0 : i32
    %c0_i32_0 = arith.constant 0 : i32
    %c0_i32_1 = arith.constant 0 : i32
    return %c0_i32, %c0_i32_0 : i32, i32
  }
  func.func @transform_14(%arg0: i32, %arg1: i32) -> (i32, i32) {
    %c0_i32 = arith.constant 0 : i32
    %c0_i32_0 = arith.constant 0 : i32
    %c0_i32_1 = arith.constant 0 : i32
    return %c0_i32, %c0_i32_0 : i32, i32
  }
  func.func @transform_15(%arg0: i32, %arg1: i32) -> (i32, i32) {
    %c0_i32 = arith.constant 0 : i32
    %c0_i32_0 = arith.constant 0 : i32
    %c0_i32_1 = arith.constant 0 : i32
    return %c0_i32, %c0_i32_0 : i32, i32
  }
  func.func @transform_16(%arg0: i32, %arg1: i32) -> (i32, i32) {
    %c0_i32 = arith.constant 0 : i32
    %c0_i32_0 = arith.constant 0 : i32
    %c0_i32_1 = arith.constant 0 : i32
    return %c0_i32, %c0_i32_0 : i32, i32
  }
  func.func @transform_17(%arg0: i32, %arg1: i32) -> (i32, i32) {
    %c0_i32 = arith.constant 0 : i32
    %c0_i32_0 = arith.constant 0 : i32
    return %arg1, %c0_i32 : i32, i32
  }
}

</mosaic_0001>

<llo_original>
// kernel: tpu_custom_call.1
$region0: #{tpu_custom_call.1}
  #allocation0 [shape = 'u32[]', space=smem, size = 0x4, offset = 0x4, fixed_abs, tag = 'smem constant byte address 0x4 - core index']
  #allocation1 [shape = 'u32[144,128]{1,0:T(1,128)}', space=vmem, size = 0x12000, scoped, tag = 'internal scratch']
  #allocation2 [shape = 'f32[1,48]{1,0:T(1,128)}', space=vmem, size = 0x200, scoped, tag = 'scratch operand']
  #allocation3 [shape = 'f32[1,48]{1,0:T(1,128)}', space=vmem, size = 0x200, scoped, tag = 'scratch operand']
  #allocation4 [shape = 'f32[1,24]{1,0:T(1,128)}', space=vmem, size = 0x200, scoped, tag = 'scratch operand']
  #allocation5 [shape = 'f32[1,24]{1,0:T(1,128)}', space=vmem, size = 0x200, scoped, tag = 'scratch operand']
  #allocation6 [shape = 'f32[1,12]{1,0:T(1,128)}', space=vmem, size = 0x200, scoped, tag = 'scratch operand']
  #allocation7 [shape = 'f32[1,12]{1,0:T(1,128)}', space=vmem, size = 0x200, scoped, tag = 'scratch operand']
  #allocation8 [shape = 'f32[1,8]{1,0:T(1,128)}', space=vmem, size = 0x200, scoped, tag = 'scratch operand']
  #allocation9 [shape = 'f32[1,8]{1,0:T(1,128)}', space=vmem, size = 0x200, scoped, tag = 'scratch operand']
  %s0 = inlined_call_operand.vmem [shape: bf16[8,16], index: 0, kind: input, shape index: {}]
  %s1 = inlined_call_operand.vmem [shape: bf16[16,48], index: 1, kind: input, shape index: {}]
  %s2 = inlined_call_operand.vmem [shape: f32[1,48], index: 2, kind: input, shape index: {}]
  %s3 = inlined_call_operand.vmem [shape: f32[1,48], index: 3, kind: input, shape index: {}]
  %s4 = inlined_call_operand.vmem [shape: bf16[48,24], index: 4, kind: input, shape index: {}]
  %s5 = inlined_call_operand.vmem [shape: f32[1,24], index: 5, kind: input, shape index: {}]
  %s6 = inlined_call_operand.vmem [shape: f32[1,24], index: 6, kind: input, shape index: {}]
  %s7 = inlined_call_operand.vmem [shape: bf16[24,12], index: 7, kind: input, shape index: {}]
  %s8 = inlined_call_operand.vmem [shape: f32[1,12], index: 8, kind: input, shape index: {}]
  %s9 = inlined_call_operand.vmem [shape: f32[1,12], index: 9, kind: input, shape index: {}]
  %s10 = inlined_call_operand.vmem [shape: bf16[12,8], index: 10, kind: input, shape index: {}]
  %s11 = inlined_call_operand.vmem [shape: f32[1,8], index: 11, kind: input, shape index: {}]
  %s12 = inlined_call_operand.vmem [shape: f32[1,8], index: 12, kind: input, shape index: {}]
  %s13 = inlined_call_operand.vmem [shape: f32[1,8], index: 13, kind: input, shape index: {}]
  %s14 = inlined_call_operand.vmem [shape: f32[1,8], index: 14, kind: input, shape index: {}]
  %s15 = inlined_call_operand.vmem [shape: f32[1,8], index: 15, kind: input, shape index: {}]
  %s16 = inlined_call_operand.vmem [shape: f32[1,2], index: 16, kind: input, shape index: {}]
  %s17 = inlined_call_operand.hbm [shape: f32[8,8], index: 17, kind: output, shape index: {}]
  %s18 = sld [smem:[#allocation0]]
  $region145: #{tpu_custom_call.1} parent=0
    _
  %s20 = ssub.s32 1, %s18
  %s21 = scalar_select 0, %s20, %s18
  $region1: #{tpu_custom_call.1} parent=0
    #allocation10 [shape = 'u8[512]{0}', space=smem, size = 0x200, scoped, tag = 'input window, operand 16, single buffered']
    #allocation11 [shape = 's32[2]{0}', space=sflag, size = 0x8, scoped, tag = 'scoped memory for tpu_custom_call.1']
    #allocation12 [shape = 's32[2]{0}', space=sflag, size = 0x8, scoped, tag = 'scoped memory for tpu_custom_call.1']
    #allocation13 [shape = 'u8[4096]{0}', space=vmem, size = 0x1000, scoped, tag = 'output window, operand 0, single buffered']
    %22 = vsyncpa [#allocation12], 0
    %23 = vsyncpa [#allocation11], 0
    loop: start=0, step=1, limit=7
    $region2: #{tpu_custom_call.1} parent=1 // loop_pre_header
      _
    $region3: #{tpu_custom_call.1} parent=1 // loop_header
      %s25 = sphi 0, %s29
      %p26 = scmp.ge.s32.totalorder %s25, 7
      %s32 = sphi 0, %s44
      %s33 = sphi 0, %s40
      %s34 = sphi 0, %s32
      %s35 = sphi 0, %s33
      %s36 = sphi 0, %s34
      %s37 = sphi 0, %s35
      %s47 = sphi 0, %s49
      %s50 = sphi 0, %s47
      %s51 = sphi 0, %s50
      %s67 = sphi 0, %s51
      %s71 = sphi 0, %s71
      %s73 = sphi 0, %s71
      %s74 = sphi 0, %s73
      %s88 = sphi 0, %s74
      %s92 = sphi 0, %s92
      %s94 = sphi 0, %s92
      %s95 = sphi 0, %s94
      %s109 = sphi 0, %s95
      %s113 = sphi 0, %s113
      %s115 = sphi 0, %s113
      %s116 = sphi 0, %s115
      %s130 = sphi 0, %s116
      %s134 = sphi 0, %s134
      %s136 = sphi 0, %s134
      %s137 = sphi 0, %s136
      %s151 = sphi 0, %s137
      %s155 = sphi 0, %s155
      %s157 = sphi 0, %s155
      %s158 = sphi 0, %s157
      %s172 = sphi 0, %s158
      %s176 = sphi 0, %s176
      %s178 = sphi 0, %s176
      %s179 = sphi 0, %s178
      %s193 = sphi 0, %s179
      %s197 = sphi 0, %s197
      %s199 = sphi 0, %s197
      %s200 = sphi 0, %s199
      %s214 = sphi 0, %s200
      %s218 = sphi 0, %s218
      %s220 = sphi 0, %s218
      %s221 = sphi 0, %s220
      %s235 = sphi 0, %s221
      %s239 = sphi 0, %s239
      %s241 = sphi 0, %s239
      %s242 = sphi 0, %s241
      %s256 = sphi 0, %s242
      %s260 = sphi 0, %s260
      %s262 = sphi 0, %s260
      %s263 = sphi 0, %s262
      %s277 = sphi 0, %s263
      %s281 = sphi 0, %s281
      %s283 = sphi 0, %s281
      %s284 = sphi 0, %s283
      %s298 = sphi 0, %s284
      %s302 = sphi 0, %s302
      %s304 = sphi 0, %s302
      %s305 = sphi 0, %s304
      %s319 = sphi 0, %s305
      %s323 = sphi 0, %s323
      %s325 = sphi 0, %s323
      %s326 = sphi 0, %s325
      %s340 = sphi 0, %s326
      %s344 = sphi 0, %s344
      %s346 = sphi 0, %s344
      %s347 = sphi 0, %s346
      %s361 = sphi 0, %s347
      %s365 = sphi 0, %s365
      %s367 = sphi 0, %s365
      %s368 = sphi 0, %s367
      %s382 = sphi 0, %s368
      %s386 = sphi 0, %s386
      %s388 = sphi 0, %s386
      %s389 = sphi 0, %s388
      %s403 = sphi 0, %s389
      %s409 = sphi 0, %s411
      %s412 = sphi 0, %s409
      %s413 = sphi 0, %s412
      %s429 = sphi 0, %s413
    $region4: #{tpu_custom_call.1} parent=1 // loop_header_branch
      %28 = sbr.rel (%p26) target = $region8
    $region5: #{tpu_custom_call.1} parent=1 // loop_body
      %s30 = ssub.s32 %s25, 1
      %s31 = ssub.s32 %s25, 2
      %s38 = sadd.s32 1, %s33
      %p39 = scmp.ge.s32.totalorder %s38, 1
      %s40 = scalar_select %p39, 0, %s38
      %s41 = sadd.s32 1, %s32
      %s42 = scalar_select %p39, %s41, %s32
      %p43 = scmp.ge.s32.totalorder %s42, 5
      %s44 = scalar_select %p43, 0, %s42
      %s45 = ssub.s32 %s33, %s40
      %p46 = scmp.eq.s32.totalorder %s45, 0
      %s48 = sadd.s32 %s47, 1
      %s49 = scalar_select %p46, %s47, %s48
      %p52 = pneg %p46
      %p53 = scmp.eq.s32.totalorder %s25, 4
      %p54 = por %p52, %p53
      %p55 = scmp.ne.s32.totalorder %s47, %s50
      %p56 = scmp.eq.s32.totalorder %s25, 0
      %p57 = por %p55, %p56
      %p58 = scmp.ne.s32.totalorder %s47, %s50
      %p59 = scmp.eq.s32.totalorder %s30, 4
      %p60 = por %p58, %p59
      %p61 = scmp.ne.s32.totalorder %s50, %s51
      %p62 = scmp.eq.s32.totalorder %s30, 0
      %p63 = por %p61, %p62
      %p64 = scmp.ne.s32.totalorder %s50, %s51
      %p65 = scmp.eq.s32.totalorder %s31, 4
      %p66 = por %p64, %p65
      %p68 = scmp.ne.s32.totalorder %s51, %s67
      %p69 = scmp.eq.s32.totalorder %s31, 0
      %p70 = por %p68, %p69
      %s72 = sadd.s32 %s71, 1
      %p75 = scmp.eq.s32.totalorder %s25, 4
      %p76 = scmp.ne.s32.totalorder %s71, %s73
      %p77 = scmp.eq.s32.totalorder %s25, 0
      %p78 = por %p76, %p77
      %p79 = scmp.ne.s32.totalorder %s71, %s73
      %p80 = scmp.eq.s32.totalorder %s30, 4
      %p81 = por %p79, %p80
      %p82 = scmp.ne.s32.totalorder %s73, %s74
      %p83 = scmp.eq.s32.totalorder %s30, 0
      %p84 = por %p82, %p83
      %p85 = scmp.ne.s32.totalorder %s73, %s74
      %p86 = scmp.eq.s32.totalorder %s31, 4
      %p87 = por %p85, %p86
      %p89 = scmp.ne.s32.totalorder %s74, %s88
      %p90 = scmp.eq.s32.totalorder %s31, 0
      %p91 = por %p89, %p90
      %s93 = sadd.s32 %s92, 1
      %p96 = scmp.eq.s32.totalorder %s25, 4
      %p97 = scmp.ne.s32.totalorder %s92, %s94
      %p98 = scmp.eq.s32.totalorder %s25, 0
      %p99 = por %p97, %p98
      %p100 = scmp.ne.s32.totalorder %s92, %s94
      %p101 = scmp.eq.s32.totalorder %s30, 4
      %p102 = por %p100, %p101
      %p103 = scmp.ne.s32.totalorder %s94, %s95
      %p104 = scmp.eq.s32.totalorder %s30, 0
      %p105 = por %p103, %p104
      %p106 = scmp.ne.s32.totalorder %s94, %s95
      %p107 = scmp.eq.s32.totalorder %s31, 4
      %p108 = por %p106, %p107
      %p110 = scmp.ne.s32.totalorder %s95, %s109
      %p111 = scmp.eq.s32.totalorder %s31, 0
      %p112 = por %p110, %p111
      %s114 = sadd.s32 %s113, 1
      %p117 = scmp.eq.s32.totalorder %s25, 4
      %p118 = scmp.ne.s32.totalorder %s113, %s115
      %p119 = scmp.eq.s32.totalorder %s25, 0
      %p120 = por %p118, %p119
      %p121 = scmp.ne.s32.totalorder %s113, %s115
      %p122 = scmp.eq.s32.totalorder %s30, 4
      %p123 = por %p121, %p122
      %p124 = scmp.ne.s32.totalorder %s115, %s116
      %p125 = scmp.eq.s32.totalorder %s30, 0
      %p126 = por %p124, %p125
      %p127 = scmp.ne.s32.totalorder %s115, %s116
      %p128 = scmp.eq.s32.totalorder %s31, 4
      %p129 = por %p127, %p128
      %p131 = scmp.ne.s32.totalorder %s116, %s130
      %p132 = scmp.eq.s32.totalorder %s31, 0
      %p133 = por %p131, %p132
      %s135 = sadd.s32 %s134, 1
      %p138 = scmp.eq.s32.totalorder %s25, 4
      %p139 = scmp.ne.s32.totalorder %s134, %s136
      %p140 = scmp.eq.s32.totalorder %s25, 0
      %p141 = por %p139, %p140
      %p142 = scmp.ne.s32.totalorder %s134, %s136
      %p143 = scmp.eq.s32.totalorder %s30, 4
      %p144 = por %p142, %p143
      %p145 = scmp.ne.s32.totalorder %s136, %s137
      %p146 = scmp.eq.s32.totalorder %s30, 0
      %p147 = por %p145, %p146
      %p148 = scmp.ne.s32.totalorder %s136, %s137
      %p149 = scmp.eq.s32.totalorder %s31, 4
      %p150 = por %p148, %p149
      %p152 = scmp.ne.s32.totalorder %s137, %s151
      %p153 = scmp.eq.s32.totalorder %s31, 0
      %p154 = por %p152, %p153
      %s156 = sadd.s32 %s155, 1
      %p159 = scmp.eq.s32.totalorder %s25, 4
      %p160 = scmp.ne.s32.totalorder %s155, %s157
      %p161 = scmp.eq.s32.totalorder %s25, 0
      %p162 = por %p160, %p161
      %p163 = scmp.ne.s32.totalorder %s155, %s157
      %p164 = scmp.eq.s32.totalorder %s30, 4
      %p165 = por %p163, %p164
      %p166 = scmp.ne.s32.totalorder %s157, %s158
      %p167 = scmp.eq.s32.totalorder %s30, 0
      %p168 = por %p166, %p167
      %p169 = scmp.ne.s32.totalorder %s157, %s158
      %p170 = scmp.eq.s32.totalorder %s31, 4
      %p171 = por %p169, %p170
      %p173 = scmp.ne.s32.totalorder %s158, %s172
      %p174 = scmp.eq.s32.totalorder %s31, 0
      %p175 = por %p173, %p174
      %s177 = sadd.s32 %s176, 1
      %p180 = scmp.eq.s32.totalorder %s25, 4
      %p181 = scmp.ne.s32.totalorder %s176, %s178
      %p182 = scmp.eq.s32.totalorder %s25, 0
      %p183 = por %p181, %p182
      %p184 = scmp.ne.s32.totalorder %s176, %s178
      %p185 = scmp.eq.s32.totalorder %s30, 4
      %p186 = por %p184, %p185
      %p187 = scmp.ne.s32.totalorder %s178, %s179
      %p188 = scmp.eq.s32.totalorder %s30, 0
      %p189 = por %p187, %p188
      %p190 = scmp.ne.s32.totalorder %s178, %s179
      %p191 = scmp.eq.s32.totalorder %s31, 4
      %p192 = por %p190, %p191
      %p194 = scmp.ne.s32.totalorder %s179, %s193
      %p195 = scmp.eq.s32.totalorder %s31, 0
      %p196 = por %p194, %p195
      %s198 = sadd.s32 %s197, 1
      %p201 = scmp.eq.s32.totalorder %s25, 4
      %p202 = scmp.ne.s32.totalorder %s197, %s199
      %p203 = scmp.eq.s32.totalorder %s25, 0
      %p204 = por %p202, %p203
      %p205 = scmp.ne.s32.totalorder %s197, %s199
      %p206 = scmp.eq.s32.totalorder %s30, 4
      %p207 = por %p205, %p206
      %p208 = scmp.ne.s32.totalorder %s199, %s200
      %p209 = scmp.eq.s32.totalorder %s30, 0
      %p210 = por %p208, %p209
      %p211 = scmp.ne.s32.totalorder %s199, %s200
      %p212 = scmp.eq.s32.totalorder %s31, 4
      %p213 = por %p211, %p212
      %p215 = scmp.ne.s32.totalorder %s200, %s214
      %p216 = scmp.eq.s32.totalorder %s31, 0
      %p217 = por %p215, %p216
      %s219 = sadd.s32 %s218, 1
      %p222 = scmp.eq.s32.totalorder %s25, 4
      %p223 = scmp.ne.s32.totalorder %s218, %s220
      %p224 = scmp.eq.s32.totalorder %s25, 0
      %p225 = por %p223, %p224
      %p226 = scmp.ne.s32.totalorder %s218, %s220
      %p227 = scmp.eq.s32.totalorder %s30, 4
      %p228 = por %p226, %p227
      %p229 = scmp.ne.s32.totalorder %s220, %s221
      %p230 = scmp.eq.s32.totalorder %s30, 0
      %p231 = por %p229, %p230
      %p232 = scmp.ne.s32.totalorder %s220, %s221
      %p233 = scmp.eq.s32.totalorder %s31, 4
      %p234 = por %p232, %p233
      %p236 = scmp.ne.s32.totalorder %s221, %s235
      %p237 = scmp.eq.s32.totalorder %s31, 0
      %p238 = por %p236, %p237
      %s240 = sadd.s32 %s239, 1
      %p243 = scmp.eq.s32.totalorder %s25, 4
      %p244 = scmp.ne.s32.totalorder %s239, %s241
      %p245 = scmp.eq.s32.totalorder %s25, 0
      %p246 = por %p244, %p245
      %p247 = scmp.ne.s32.totalorder %s239, %s241
      %p248 = scmp.eq.s32.totalorder %s30, 4
      %p249 = por %p247, %p248
      %p250 = scmp.ne.s32.totalorder %s241, %s242
      %p251 = scmp.eq.s32.totalorder %s30, 0
      %p252 = por %p250, %p251
      %p253 = scmp.ne.s32.totalorder %s241, %s242
      %p254 = scmp.eq.s32.totalorder %s31, 4
      %p255 = por %p253, %p254
      %p257 = scmp.ne.s32.totalorder %s242, %s256
      %p258 = scmp.eq.s32.totalorder %s31, 0
      %p259 = por %p257, %p258
      %s261 = sadd.s32 %s260, 1
      %p264 = scmp.eq.s32.totalorder %s25, 4
      %p265 = scmp.ne.s32.totalorder %s260, %s262
      %p266 = scmp.eq.s32.totalorder %s25, 0
      %p267 = por %p265, %p266
      %p268 = scmp.ne.s32.totalorder %s260, %s262
      %p269 = scmp.eq.s32.totalorder %s30, 4
      %p270 = por %p268, %p269
      %p271 = scmp.ne.s32.totalorder %s262, %s263
      %p272 = scmp.eq.s32.totalorder %s30, 0
      %p273 = por %p271, %p272
      %p274 = scmp.ne.s32.totalorder %s262, %s263
      %p275 = scmp.eq.s32.totalorder %s31, 4
      %p276 = por %p274, %p275
      %p278 = scmp.ne.s32.totalorder %s263, %s277
      %p279 = scmp.eq.s32.totalorder %s31, 0
      %p280 = por %p278, %p279
      %s282 = sadd.s32 %s281, 1
      %p285 = scmp.eq.s32.totalorder %s25, 4
      %p286 = scmp.ne.s32.totalorder %s281, %s283
      %p287 = scmp.eq.s32.totalorder %s25, 0
      %p288 = por %p286, %p287
      %p289 = scmp.ne.s32.totalorder %s281, %s283
      %p290 = scmp.eq.s32.totalorder %s30, 4
      %p291 = por %p289, %p290
      %p292 = scmp.ne.s32.totalorder %s283, %s284
      %p293 = scmp.eq.s32.totalorder %s30, 0
      %p294 = por %p292, %p293
      %p295 = scmp.ne.s32.totalorder %s283, %s284
      %p296 = scmp.eq.s32.totalorder %s31, 4
      %p297 = por %p295, %p296
      %p299 = scmp.ne.s32.totalorder %s284, %s298
      %p300 = scmp.eq.s32.totalorder %s31, 0
      %p301 = por %p299, %p300
      %s303 = sadd.s32 %s302, 1
      %p306 = scmp.eq.s32.totalorder %s25, 4
      %p307 = scmp.ne.s32.totalorder %s302, %s304
      %p308 = scmp.eq.s32.totalorder %s25, 0
      %p309 = por %p307, %p308
      %p310 = scmp.ne.s32.totalorder %s302, %s304
      %p311 = scmp.eq.s32.totalorder %s30, 4
      %p312 = por %p310, %p311
      %p313 = scmp.ne.s32.totalorder %s304, %s305
      %p314 = scmp.eq.s32.totalorder %s30, 0
      %p315 = por %p313, %p314
      %p316 = scmp.ne.s32.totalorder %s304, %s305
      %p317 = scmp.eq.s32.totalorder %s31, 4
      %p318 = por %p316, %p317
      %p320 = scmp.ne.s32.totalorder %s305, %s319
      %p321 = scmp.eq.s32.totalorder %s31, 0
      %p322 = por %p320, %p321
      %s324 = sadd.s32 %s323, 1
      %p327 = scmp.eq.s32.totalorder %s25, 4
      %p328 = scmp.ne.s32.totalorder %s323, %s325
      %p329 = scmp.eq.s32.totalorder %s25, 0
      %p330 = por %p328, %p329
      %p331 = scmp.ne.s32.totalorder %s323, %s325
      %p332 = scmp.eq.s32.totalorder %s30, 4
      %p333 = por %p331, %p332
      %p334 = scmp.ne.s32.totalorder %s325, %s326
      %p335 = scmp.eq.s32.totalorder %s30, 0
      %p336 = por %p334, %p335
      %p337 = scmp.ne.s32.totalorder %s325, %s326
      %p338 = scmp.eq.s32.totalorder %s31, 4
      %p339 = por %p337, %p338
      %p341 = scmp.ne.s32.totalorder %s326, %s340
      %p342 = scmp.eq.s32.totalorder %s31, 0
      %p343 = por %p341, %p342
      %s345 = sadd.s32 %s344, 1
      %p348 = scmp.eq.s32.totalorder %s25, 4
      %p349 = scmp.ne.s32.totalorder %s344, %s346
      %p350 = scmp.eq.s32.totalorder %s25, 0
      %p351 = por %p349, %p350
      %p352 = scmp.ne.s32.totalorder %s344, %s346
      %p353 = scmp.eq.s32.totalorder %s30, 4
      %p354 = por %p352, %p353
      %p355 = scmp.ne.s32.totalorder %s346, %s347
      %p356 = scmp.eq.s32.totalorder %s30, 0
      %p357 = por %p355, %p356
      %p358 = scmp.ne.s32.totalorder %s346, %s347
      %p359 = scmp.eq.s32.totalorder %s31, 4
      %p360 = por %p358, %p359
      %p362 = scmp.ne.s32.totalorder %s347, %s361
      %p363 = scmp.eq.s32.totalorder %s31, 0
      %p364 = por %p362, %p363
      %s366 = sadd.s32 %s365, 1
      %p369 = scmp.eq.s32.totalorder %s25, 4
      %p370 = scmp.ne.s32.totalorder %s365, %s367
      %p371 = scmp.eq.s32.totalorder %s25, 0
      %p372 = por %p370, %p371
      %p373 = scmp.ne.s32.totalorder %s365, %s367
      %p374 = scmp.eq.s32.totalorder %s30, 4
      %p375 = por %p373, %p374
      %p376 = scmp.ne.s32.totalorder %s367, %s368
      %p377 = scmp.eq.s32.totalorder %s30, 0
      %p378 = por %p376, %p377
      %p379 = scmp.ne.s32.totalorder %s367, %s368
      %p380 = scmp.eq.s32.totalorder %s31, 4
      %p381 = por %p379, %p380
      %p383 = scmp.ne.s32.totalorder %s368, %s382
      %p384 = scmp.eq.s32.totalorder %s31, 0
      %p385 = por %p383, %p384
      %s387 = sadd.s32 %s386, 1
      %p390 = scmp.eq.s32.totalorder %s25, 4
      %p391 = scmp.ne.s32.totalorder %s386, %s388
      %p392 = scmp.eq.s32.totalorder %s25, 0
      %p393 = por %p391, %p392
      %p394 = scmp.ne.s32.totalorder %s386, %s388
      %p395 = scmp.eq.s32.totalorder %s30, 4
      %p396 = por %p394, %p395
      %p397 = scmp.ne.s32.totalorder %s388, %s389
      %p398 = scmp.eq.s32.totalorder %s30, 0
      %p399 = por %p397, %p398
      %p400 = scmp.ne.s32.totalorder %s388, %s389
      %p401 = scmp.eq.s32.totalorder %s31, 4
      %p402 = por %p400, %p401
      %p404 = scmp.ne.s32.totalorder %s389, %s403
      %p405 = scmp.eq.s32.totalorder %s31, 0
      %p406 = por %p404, %p405
      %s407 = ssub.s32 %s33, %s40
      %p408 = scmp.eq.s32.totalorder %s407, 0
      %s410 = sadd.s32 %s409, 1
      %s411 = scalar_select %p408, %s409, %s410
      %p414 = pneg %p408
      %p415 = scmp.eq.s32.totalorder %s25, 4
      %p416 = por %p414, %p415
      %p417 = scmp.ne.s32.totalorder %s409, %s412
      %p418 = scmp.eq.s32.totalorder %s25, 0
      %p419 = por %p417, %p418
      %p420 = scmp.ne.s32.totalorder %s409, %s412
      %p421 = scmp.eq.s32.totalorder %s30, 4
      %p422 = por %p420, %p421
      %p423 = scmp.ne.s32.totalorder %s412, %s413
      %p424 = scmp.eq.s32.totalorder %s30, 0
      %p425 = por %p423, %p424
      %p426 = scmp.ne.s32.totalorder %s412, %s413
      %p427 = scmp.eq.s32.totalorder %s31, 4
      %p428 = por %p426, %p427
      %p430 = scmp.ne.s32.totalorder %s413, %s429
      %p431 = scmp.eq.s32.totalorder %s31, 0
      %p432 = por %p430, %p431
      %p433 = scmp.le.s32.totalorder 1, %s25
      %p434 = scmp.lt.s32.totalorder %s25, 6
      %p435 = pnand %p433, %p434
      %p436 = pneg %p435
      // Predicated region
      $region9: #{tpu_custom_call.1} parent=5 // pred_check
        _
      $region10: #{tpu_custom_call.1} parent=5 // pred_check_branch
        %438 = sbr.rel (%p435) target = $region12
      $region11: #{tpu_custom_call.1} parent=5 // pred_region
        %s439 = ssub.s32 %s25, 1
        // Predicated region
        $region13: #{tpu_custom_call.1} parent=11 // pred_check
          %p440 = pneg %p63
        $region14: #{tpu_custom_call.1} parent=11 // pred_check_branch
          %442 = sbr.rel (%p440) target = $region16
        $region15: #{tpu_custom_call.1} parent=11 // pred_region
          %p443 = scmp.lt.s32.totalorder %s35, 0
          %s444 = scalar_select %p443, %s35, 0
          %s445 = smul.addr %s444, 4
          %s446 = scalar_lea.vmem %s0, %s445
        $region16: #{tpu_custom_call.1} parent=11 // pred_fallthru
          _
        // Predicated region
        $region17: #{tpu_custom_call.1} parent=11 // pred_check
          %p447 = pneg %p84
        $region18: #{tpu_custom_call.1} parent=11 // pred_check_branch
          %449 = sbr.rel (%p447) target = $region20
        $region19: #{tpu_custom_call.1} parent=11 // pred_region
          _
        $region20: #{tpu_custom_call.1} parent=11 // pred_fallthru
          _
        // Predicated region
        $region21: #{tpu_custom_call.1} parent=11 // pred_check
          %p450 = pneg %p105
        $region22: #{tpu_custom_call.1} parent=11 // pred_check_branch
          %452 = sbr.rel (%p450) target = $region24
        $region23: #{tpu_custom_call.1} parent=11 // pred_region
          _
        $region24: #{tpu_custom_call.1} parent=11 // pred_fallthru
          _
        // Predicated region
        $region25: #{tpu_custom_call.1} parent=11 // pred_check
          %p453 = pneg %p126
        $region26: #{tpu_custom_call.1} parent=11 // pred_check_branch
          %455 = sbr.rel (%p453) target = $region28
        $region27: #{tpu_custom_call.1} parent=11 // pred_region
          _
        $region28: #{tpu_custom_call.1} parent=11 // pred_fallthru
          _
        // Predicated region
        $region29: #{tpu_custom_call.1} parent=11 // pred_check
          %p456 = pneg %p147
        $region30: #{tpu_custom_call.1} parent=11 // pred_check_branch
          %458 = sbr.rel (%p456) target = $region32
        $region31: #{tpu_custom_call.1} parent=11 // pred_region
          _
        $region32: #{tpu_custom_call.1} parent=11 // pred_fallthru
          _
        // Predicated region
        $region33: #{tpu_custom_call.1} parent=11 // pred_check
          %p459 = pneg %p168
        $region34: #{tpu_custom_call.1} parent=11 // pred_check_branch
          %461 = sbr.rel (%p459) target = $region36
        $region35: #{tpu_custom_call.1} parent=11 // pred_region
          _
        $region36: #{tpu_custom_call.1} parent=11 // pred_fallthru
          _
        // Predicated region
        $region37: #{tpu_custom_call.1} parent=11 // pred_check
          %p462 = pneg %p189
        $region38: #{tpu_custom_call.1} parent=11 // pred_check_branch
          %464 = sbr.rel (%p462) target = $region40
        $region39: #{tpu_custom_call.1} parent=11 // pred_region
          _
        $region40: #{tpu_custom_call.1} parent=11 // pred_fallthru
          _
        // Predicated region
        $region41: #{tpu_custom_call.1} parent=11 // pred_check
          %p465 = pneg %p210
        $region42: #{tpu_custom_call.1} parent=11 // pred_check_branch
          %467 = sbr.rel (%p465) target = $region44
        $region43: #{tpu_custom_call.1} parent=11 // pred_region
          _
        $region44: #{tpu_custom_call.1} parent=11 // pred_fallthru
          _
        // Predicated region
        $region45: #{tpu_custom_call.1} parent=11 // pred_check
          %p468 = pneg %p231
        $region46: #{tpu_custom_call.1} parent=11 // pred_check_branch
          %470 = sbr.rel (%p468) target = $region48
        $region47: #{tpu_custom_call.1} parent=11 // pred_region
          _
        $region48: #{tpu_custom_call.1} parent=11 // pred_fallthru
          _
        // Predicated region
        $region49: #{tpu_custom_call.1} parent=11 // pred_check
          %p471 = pneg %p252
        $region50: #{tpu_custom_call.1} parent=11 // pred_check_branch
          %473 = sbr.rel (%p471) target = $region52
        $region51: #{tpu_custom_call.1} parent=11 // pred_region
          _
        $region52: #{tpu_custom_call.1} parent=11 // pred_fallthru
          _
        // Predicated region
        $region53: #{tpu_custom_call.1} parent=11 // pred_check
          %p474 = pneg %p273
        $region54: #{tpu_custom_call.1} parent=11 // pred_check_branch
          %476 = sbr.rel (%p474) target = $region56
        $region55: #{tpu_custom_call.1} parent=11 // pred_region
          _
        $region56: #{tpu_custom_call.1} parent=11 // pred_fallthru
          _
        // Predicated region
        $region57: #{tpu_custom_call.1} parent=11 // pred_check
          %p477 = pneg %p294
        $region58: #{tpu_custom_call.1} parent=11 // pred_check_branch
          %479 = sbr.rel (%p477) target = $region60
        $region59: #{tpu_custom_call.1} parent=11 // pred_region
          _
        $region60: #{tpu_custom_call.1} parent=11 // pred_fallthru
          _
        // Predicated region
        $region61: #{tpu_custom_call.1} parent=11 // pred_check
          %p480 = pneg %p315
        $region62: #{tpu_custom_call.1} parent=11 // pred_check_branch
          %482 = sbr.rel (%p480) target = $region64
        $region63: #{tpu_custom_call.1} parent=11 // pred_region
          _
        $region64: #{tpu_custom_call.1} parent=11 // pred_fallthru
          _
        // Predicated region
        $region65: #{tpu_custom_call.1} parent=11 // pred_check
          %p483 = pneg %p336
        $region66: #{tpu_custom_call.1} parent=11 // pred_check_branch
          %485 = sbr.rel (%p483) target = $region68
        $region67: #{tpu_custom_call.1} parent=11 // pred_region
          _
        $region68: #{tpu_custom_call.1} parent=11 // pred_fallthru
          _
        // Predicated region
        $region69: #{tpu_custom_call.1} parent=11 // pred_check
          %p486 = pneg %p357
        $region70: #{tpu_custom_call.1} parent=11 // pred_check_branch
          %488 = sbr.rel (%p486) target = $region72
        $region71: #{tpu_custom_call.1} parent=11 // pred_region
          _
        $region72: #{tpu_custom_call.1} parent=11 // pred_fallthru
          _
        // Predicated region
        $region73: #{tpu_custom_call.1} parent=11 // pred_check
          %p489 = pneg %p378
        $region74: #{tpu_custom_call.1} parent=11 // pred_check_branch
          %491 = sbr.rel (%p489) target = $region76
        $region75: #{tpu_custom_call.1} parent=11 // pred_region
          _
        $region76: #{tpu_custom_call.1} parent=11 // pred_fallthru
          _
        // Predicated region
        $region77: #{tpu_custom_call.1} parent=11 // pred_check
          %p492 = pneg %p399
        $region78: #{tpu_custom_call.1} parent=11 // pred_check_branch
          %494 = sbr.rel (%p492) target = $region80
        $region79: #{tpu_custom_call.1} parent=11 // pred_region
          %s496 = ssub.s32 16, 16
          %497 = vsyncadd [#allocation12], %s496
          %s499 = sshll.u32 %s16, 4
          %s500 = int_to_ptr.vmem [resolvable:$true] %s499
          %502 = dma.vmem_to_smem %s500, 16, [#allocation10], [#allocation12]
        $region80: #{tpu_custom_call.1} parent=11 // pred_fallthru
          _
      $region12: #{tpu_custom_call.1} parent=5 // pred_fallthru
        _
      %p503 = scmp.lt.s32.totalorder %s25, 5
      // Predicated region
      $region81: #{tpu_custom_call.1} parent=5 // pred_check
        %p504 = pneg %p503
      $region82: #{tpu_custom_call.1} parent=5 // pred_check_branch
        %506 = sbr.rel (%p504) target = $region84
      $region83: #{tpu_custom_call.1} parent=5 // pred_region
        _
      $region84: #{tpu_custom_call.1} parent=5 // pred_fallthru
        _
      %p507 = scmp.le.s32.totalorder 1, %s25
      %p508 = scmp.lt.s32.totalorder %s25, 6
      %p509 = pnand %p507, %p508
      %p510 = pneg %p509
      // Predicated region
      $region85: #{tpu_custom_call.1} parent=5 // pred_check
        _
      $region86: #{tpu_custom_call.1} parent=5 // pred_check_branch
        %512 = sbr.rel (%p509) target = $region88
      $region87: #{tpu_custom_call.1} parent=5 // pred_region
        %s513 = ssub.s32 %s25, 1
        // Predicated region
        $region89: #{tpu_custom_call.1} parent=87 // pred_check
          %p514 = pneg %p399
        $region90: #{tpu_custom_call.1} parent=87 // pred_check_branch
          %516 = sbr.rel (%p514) target = $region92
        $region91: #{tpu_custom_call.1} parent=87 // pred_region
          %517 = dma.done [#allocation12], 16
        $region92: #{tpu_custom_call.1} parent=87 // pred_fallthru
          _
        %518 = sfence
        %p519 = scmp.lt.s32.totalorder %s35, 0
        %s520 = scalar_select %p519, %s35, 0
        %s521 = smul.addr %s520, 4
        %s522 = scalar_lea.vmem %s0, %s521
        %p523 = pneg %p63
        %p524 = pneg %p60
        %p525 = pneg %p84
        %p526 = pneg %p81
        %p527 = pneg %p105
        %p528 = pneg %p102
        %p529 = pneg %p126
        %p530 = pneg %p123
        %p531 = pneg %p147
        %p532 = pneg %p144
        %p533 = pneg %p168
        %p534 = pneg %p165
        %p535 = pneg %p189
        %p536 = pneg %p186
        %p537 = pneg %p210
        %p538 = pneg %p207
        %p539 = pneg %p231
        %p540 = pneg %p228
        %p541 = pneg %p252
        %p542 = pneg %p249
        %p543 = pneg %p273
        %p544 = pneg %p270
        %p545 = pneg %p294
        %p546 = pneg %p291
        %p547 = pneg %p315
        %p548 = pneg %p312
        %p549 = pneg %p336
        %p550 = pneg %p333
        %p551 = pneg %p357
        %p552 = pneg %p354
        %p553 = pneg %p378
        %p554 = pneg %p375
        %p555 = pneg %p399
        %p556 = pneg %p396
        %p557 = pneg %p425
        %p558 = pneg %p422
        %p559 = scmp.lt.s32.totalorder %s35, 0
        %s560 = scalar_select %p559, %s35, 0
        %s561 = smul.addr %s560, 4
        %s562 = scalar_lea.vmem %s0, %s561
        %p564 = scmp.eq.s32.totalorder %s34, 0
        %p565 = scmp.eq.s32.totalorder %s35, 0
        %p566 = pnand %p564, %p565
        %p567 = pneg %p566
        // Predicated region
        $region93: #{tpu_custom_call.1} parent=87 // pred_check
          _
        $region94: #{tpu_custom_call.1} parent=87 // pred_check_branch
          %569 = sbr.rel (%p566) target = $region96
        $region95: #{tpu_custom_call.1} parent=87 // pred_region
          %vm570 = vcmask 385024
          %571 = vst.msk [vmem:[#allocation2] sm:$0x1] %vm570, 0.0
          %572 = vst.msk [vmem:[#allocation3] sm:$0x1] %vm570, 0.0
          %vm573 = vcmask 188416
          %574 = vst.msk [vmem:[#allocation4] sm:$0x1] %vm573, 0.0
          %575 = vst.msk [vmem:[#allocation5] sm:$0x1] %vm573, 0.0
          %vm576 = vcmask 90112
          %577 = vst.msk [vmem:[#allocation6] sm:$0x1] %vm576, 0.0
          %578 = vst.msk [vmem:[#allocation7] sm:$0x1] %vm576, 0.0
          %vm579 = vcmask 57344
          %580 = vst.msk [vmem:[#allocation8] sm:$0x1] %vm579, 0.0
          %581 = vst.msk [vmem:[#allocation9] sm:$0x1] %vm579, 0.0
        $region96: #{tpu_custom_call.1} parent=87 // pred_fallthru
          _
        %p582 = scmp.eq.s32.totalorder %s34, 1
        %p583 = pnand %p582, %p565
        %p584 = pneg %p583
        // Predicated region
        $region97: #{tpu_custom_call.1} parent=87 // pred_check
          _
        $region98: #{tpu_custom_call.1} parent=87 // pred_check_branch
          %586 = sbr.rel (%p583) target = $region100
        $region99: #{tpu_custom_call.1} parent=87 // pred_region
          %v587 = vld [vmem:[#allocation2] sm:$0x1]
          %v588 = vmul.f32 %v587, 0.125
          %v589 = vld [vmem:[#allocation3] sm:$0x1]
          %v590 = vmul.f32 %v589, 0.125
          %v591 = vmul.f32 %v588, %v588
          %v592 = vsub.f32 %v590, %v591
          %v593 = vmax.f32 %v592, 0.0
          %vm594 = vcmask 385024
          %595 = vst.msk [vmem:[#allocation2] sm:$0x1] %vm594, %v588
          %v596 = vadd.f32 %v593, 1e-05
          %v597 = vrsqrt.pop %v596
          %598 = vst.msk [vmem:[#allocation3] sm:$0x1] %vm594, %v597
        $region100: #{tpu_custom_call.1} parent=87 // pred_fallthru
          _
        %p599 = scmp.eq.s32.totalorder %s34, 2
        %p600 = pnand %p599, %p565
        %p601 = pneg %p600
        // Predicated region
        $region101: #{tpu_custom_call.1} parent=87 // pred_check
          _
        $region102: #{tpu_custom_call.1} parent=87 // pred_check_branch
          %603 = sbr.rel (%p600) target = $region104
        $region103: #{tpu_custom_call.1} parent=87 // pred_region
          %v604 = vld [vmem:[#allocation4] sm:$0x1]
          %v605 = vmul.f32 %v604, 0.125
          %v606 = vld [vmem:[#allocation5] sm:$0x1]
          %v607 = vmul.f32 %v606, 0.125
          %v608 = vmul.f32 %v605, %v605
          %v609 = vsub.f32 %v607, %v608
          %v610 = vmax.f32 %v609, 0.0
          %vm611 = vcmask 188416
          %612 = vst.msk [vmem:[#allocation4] sm:$0x1] %vm611, %v605
          %v613 = vadd.f32 %v610, 1e-05
          %v614 = vrsqrt.pop %v613
          %615 = vst.msk [vmem:[#allocation5] sm:$0x1] %vm611, %v614
        $region104: #{tpu_custom_call.1} parent=87 // pred_fallthru
          _
        %p616 = scmp.eq.s32.totalorder %s34, 3
        %p617 = pnand %p616, %p565
        %p618 = pneg %p617
        // Predicated region
        $region105: #{tpu_custom_call.1} parent=87 // pred_check
          _
        $region106: #{tpu_custom_call.1} parent=87 // pred_check_branch
          %620 = sbr.rel (%p617) target = $region108
        $region107: #{tpu_custom_call.1} parent=87 // pred_region
          %v621 = vld [vmem:[#allocation6] sm:$0x1]
          %v622 = vmul.f32 %v621, 0.125
          %v623 = vld [vmem:[#allocation7] sm:$0x1]
          %v624 = vmul.f32 %v623, 0.125
          %v625 = vmul.f32 %v622, %v622
          %v626 = vsub.f32 %v624, %v625
          %v627 = vmax.f32 %v626, 0.0
          %vm628 = vcmask 90112
          %629 = vst.msk [vmem:[#allocation6] sm:$0x1] %vm628, %v622
          %v630 = vadd.f32 %v627, 1e-05
          %v631 = vrsqrt.pop %v630
          %632 = vst.msk [vmem:[#allocation7] sm:$0x1] %vm628, %v631
        $region108: #{tpu_custom_call.1} parent=87 // pred_fallthru
          _
        %p633 = scmp.eq.s32.totalorder %s34, 4
        %p634 = pnand %p633, %p565
        %p635 = pneg %p634
        // Predicated region
        $region109: #{tpu_custom_call.1} parent=87 // pred_check
          _
        $region110: #{tpu_custom_call.1} parent=87 // pred_check_branch
          %637 = sbr.rel (%p634) target = $region112
        $region111: #{tpu_custom_call.1} parent=87 // pred_region
          %v638 = vld [vmem:[#allocation8] sm:$0x1]
          %v639 = vmul.f32 %v638, 0.125
          %v640 = vld [vmem:[#allocation9] sm:$0x1]
          %v641 = vmul.f32 %v640, 0.125
          %v642 = vmul.f32 %v639, %v639
          %v643 = vsub.f32 %v641, %v642
          %v644 = vmax.f32 %v643, 0.0
          %vm645 = vcmask 57344
          %646 = vst.msk [vmem:[#allocation8] sm:$0x1] %vm645, %v639
          %v647 = vadd.f32 %v644, 1e-05
          %v648 = vrsqrt.pop %v647
          %649 = vst.msk [vmem:[#allocation9] sm:$0x1] %vm645, %v648
        $region112: #{tpu_custom_call.1} parent=87 // pred_fallthru
          _
        // Predicated region
        $region113: #{tpu_custom_call.1} parent=87 // pred_check
          %p650 = pneg %p564
        $region114: #{tpu_custom_call.1} parent=87 // pred_check_branch
          %652 = sbr.rel (%p650) target = $region116
        $region115: #{tpu_custom_call.1} parent=87 // pred_region
          %v653 = vld [vmem:[%s562] sm:$0xf]
          %v654 = vld [vmem:[%s1] sm:$0xf]
          %v655 = vld [vmem:[%s1 + $0x4] sm:$0xf]
          %v658 = vunpack.c.l.b16 %v654
          %v659 = vunpack.c.l.b16 %v655
          %v660 = vpack.c.b16 %v659, %v658
          %vm662 = vcmask 130048
          %v664 = vsel %vm662, %v653, 0
          %666 = vmatprep.subr.bf16.mxu0 0
          %667 = vmatpush1.bf16.msra.mxu0 %v660
          %668 = vmatprep.subr.bf16.mxu0 0
          %669 = vmatpush1.bf16.msra.mxu0 0
          %670 = vmatprep.subr.bf16.mxu0 0
          %671 = vmatpush1.bf16.msra.mxu0 0
          %672 = vmatprep.subr.bf16.mxu0 0
          %673 = vmatpush1.bf16.msra.mxu0 0
          %674 = vmatprep.subr.bf16.mxu0 0
          %675 = vmatpush1.bf16.msra.mxu0 0
          %676 = vmatprep.subr.bf16.mxu0 0
          %677 = vmatpush1.bf16.msra.mxu0 0
          %678 = vmatprep.subr.bf16.mxu0 0
          %679 = vmatpush1.bf16.msra.mxu0 0
          %680 = vmatprep.subr.bf16.mxu0 0
          %681 = vmatpush1.bf16.msra.mxu0 0
          %682 = vmatprep.subr.bf16.mxu0 0
          %683 = vmatpush1.bf16.msra.mxu0 0
          %684 = vmatprep.subr.bf16.mxu0 0
          %685 = vmatpush1.bf16.msra.mxu0 0
          %686 = vmatprep.subr.bf16.mxu0 0
          %687 = vmatpush1.bf16.msra.mxu0 0
          %688 = vmatprep.subr.bf16.mxu0 0
          %689 = vmatpush1.bf16.msra.mxu0 0
          %690 = vmatprep.subr.bf16.mxu0 0
          %691 = vmatpush1.bf16.msra.mxu0 0
          %692 = vmatprep.subr.bf16.mxu0 0
          %693 = vmatpush1.bf16.msra.mxu0 0
          %694 = vmatprep.subr.bf16.mxu0 0
          %695 = vmatpush1.bf16.msra.mxu0 0
          %696 = vmatprep.subr.bf16.mxu0 0
          %697 = vmatpush1.bf16.msra.mxu0 0
          %698 = vmatprep.mubr.bf16.mxu0 0
          %699 = vmatmul.mubr.bf16.gmra.mrb[0].mxu0 %v664
          %v700 = vpop.f32.mrb[0].mxu0
          %v701 = vadd.f32 0.0, %v700
          %v702 = vpop.f32.mrb[0].mxu0
          %v703 = vpop.f32.mrb[0].mxu0
          %v704 = vpop.f32.mrb[0].mxu0
          %705 = vdwg.mxu0
          %v706 = vld [vmem:[#allocation2] sm:$0x1]
          %vm707 = vcmask 392192
          %v708 = vsel %vm707, %v701, 0.0
          %v709 = vrot.slane %v708, 4
          %v710 = vadd.f32 %v708, %v709
          %v711 = vrot.slane %v710, 2
          %v712 = vadd.f32 %v710, %v711
          %v713 = vrot.slane %v712, 1
          %v714 = vadd.f32 %v712, %v713
          %v715 = vadd.f32 %v706, %v714
          %vm716 = vcmask 385024
          %717 = vst.msk [vmem:[#allocation2] sm:$0x1] %vm716, %v715
          %v718 = vld [vmem:[#allocation3] sm:$0x1]
          %v719 = vmul.f32 %v701, %v701
          %v720 = vsel %vm707, %v719, 0.0
          %v721 = vrot.slane %v720, 4
          %v722 = vadd.f32 %v720, %v721
          %v723 = vrot.slane %v722, 2
          %v724 = vadd.f32 %v722, %v723
          %v725 = vrot.slane %v724, 1
          %v726 = vadd.f32 %v724, %v725
          %v727 = vadd.f32 %v718, %v726
          %728 = vst.msk [vmem:[#allocation3] sm:$0x1] %vm716, %v727
        $region116: #{tpu_custom_call.1} parent=87 // pred_fallthru
          _
        // Predicated region
        $region117: #{tpu_custom_call.1} parent=87 // pred_check
          %p729 = pneg %p582
        $region118: #{tpu_custom_call.1} parent=87 // pred_check_branch
          %731 = sbr.rel (%p729) target = $region120
        $region119: #{tpu_custom_call.1} parent=87 // pred_region
          %v732 = vld [vmem:[%s562] sm:$0xf]
          %v733 = vld [vmem:[%s1] sm:$0xf]
          %v734 = vld [vmem:[%s1 + $0x4] sm:$0xf]
          %v737 = vunpack.c.l.b16 %v733
          %v738 = vunpack.c.l.b16 %v734
          %v739 = vpack.c.b16 %v738, %v737
          %vm741 = vcmask 130048
          %v743 = vsel %vm741, %v732, 0
          %745 = vmatprep.subr.bf16.mxu0 0
          %746 = vmatpush1.bf16.msra.mxu0 %v739
          %747 = vmatprep.subr.bf16.mxu0 0
          %748 = vmatpush1.bf16.msra.mxu0 0
          %749 = vmatprep.subr.bf16.mxu0 0
          %750 = vmatpush1.bf16.msra.mxu0 0
          %751 = vmatprep.subr.bf16.mxu0 0
          %752 = vmatpush1.bf16.msra.mxu0 0
          %753 = vmatprep.subr.bf16.mxu0 0
          %754 = vmatpush1.bf16.msra.mxu0 0
          %755 = vmatprep.subr.bf16.mxu0 0
          %756 = vmatpush1.bf16.msra.mxu0 0
          %757 = vmatprep.subr.bf16.mxu0 0
          %758 = vmatpush1.bf16.msra.mxu0 0
          %759 = vmatprep.subr.bf16.mxu0 0
          %760 = vmatpush1.bf16.msra.mxu0 0
          %761 = vmatprep.subr.bf16.mxu0 0
          %762 = vmatpush1.bf16.msra.mxu0 0
          %763 = vmatprep.subr.bf16.mxu0 0
          %764 = vmatpush1.bf16.msra.mxu0 0
          %765 = vmatprep.subr.bf16.mxu0 0
          %766 = vmatpush1.bf16.msra.mxu0 0
          %767 = vmatprep.subr.bf16.mxu0 0
          %768 = vmatpush1.bf16.msra.mxu0 0
          %769 = vmatprep.subr.bf16.mxu0 0
          %770 = vmatpush1.bf16.msra.mxu0 0
          %771 = vmatprep.subr.bf16.mxu0 0
          %772 = vmatpush1.bf16.msra.mxu0 0
          %773 = vmatprep.subr.bf16.mxu0 0
          %774 = vmatpush1.bf16.msra.mxu0 0
          %775 = vmatprep.subr.bf16.mxu0 0
          %776 = vmatpush1.bf16.msra.mxu0 0
          %777 = vmatprep.mubr.bf16.mxu0 0
          %778 = vmatmul.mubr.bf16.gmra.mrb[0].mxu0 %v743
          %v779 = vpop.f32.mrb[0].mxu0
          %v780 = vadd.f32 0.0, %v779
          %v781 = vpop.f32.mrb[0].mxu0
          %v782 = vpop.f32.mrb[0].mxu0
          %v783 = vpop.f32.mrb[0].mxu0
          %784 = vdwg.mxu0
          %v785 = vld [vmem:[#allocation2] sm:$0x1]
          %v787 = vlaneseq
          %v788 = vshrl.u32 %v787, 7
          %v789 = vsub.s32 0, %v788
          %v790 = vrot.slane %v785, %v789
          %v792 = vsub.f32 %v780, %v790
          %v793 = vld [vmem:[#allocation3] sm:$0x1]
          %v795 = vlaneseq
          %v796 = vshrl.u32 %v795, 7
          %v797 = vsub.s32 0, %v796
          %v798 = vrot.slane %v793, %v797
          %v800 = vmul.f32 %v792, %v798
          %v801 = vld [vmem:[%s2] sm:$0x1]
          %v803 = vlaneseq
          %v804 = vshrl.u32 %v803, 7
          %v805 = vsub.s32 0, %v804
          %v806 = vrot.slane %v801, %v805
          %v808 = vmul.f32 %v800, %v806
          %v809 = vld [vmem:[%s3] sm:$0x1]
          %v811 = vlaneseq
          %v812 = vshrl.u32 %v811, 7
          %v813 = vsub.s32 0, %v812
          %v814 = vrot.slane %v809, %v813
          %v816 = vadd.f32 %v808, %v814
          %v817 = vmax.f32 %v816, 0.0
          %v818 = vpack.c.bf16 %v817, %v817
          %v819 = vld [vmem:[%s4] sm:$0xf]
          %v820 = vld [vmem:[%s4 + $0x4] sm:$0xf]
          %v821 = vld [vmem:[%s4 + $0x8] sm:$0xf]
          %v822 = vld [vmem:[%s4 + $0xc] sm:$0xf]
          %v823 = vld [vmem:[%s4 + $0x10] sm:$0xf]
          %v824 = vld [vmem:[%s4 + $0x14] sm:$0xf]
          %v831 = vunpack.c.l.b16 %v819
          %v832 = vunpack.c.l.b16 %v820
          %v833 = vunpack.c.l.b16 %v821
          %v834 = vunpack.c.l.b16 %v822
          %v835 = vunpack.c.l.b16 %v823
          %v836 = vunpack.c.l.b16 %v824
          %v837 = vpack.c.b16 %v832, %v831
          %v838 = vpack.c.b16 %v834, %v833
          %v839 = vpack.c.b16 %v836, %v835
          %vm843 = vcmask 392192
          %v845 = vsel %vm843, %v818, 0
          %847 = vmatprep.subr.bf16.mxu0 0
          %848 = vmatpush1.bf16.msra.mxu0 %v837
          %849 = vmatprep.subr.bf16.mxu0 0
          %850 = vmatpush1.bf16.msra.mxu0 %v838
          %851 = vmatprep.subr.bf16.mxu0 0
          %852 = vmatpush1.bf16.msra.mxu0 %v839
          %853 = vmatprep.subr.bf16.mxu0 0
          %854 = vmatpush1.bf16.msra.mxu0 0
          %855 = vmatprep.subr.bf16.mxu0 0
          %856 = vmatpush1.bf16.msra.mxu0 0
          %857 = vmatprep.subr.bf16.mxu0 0
          %858 = vmatpush1.bf16.msra.mxu0 0
          %859 = vmatprep.subr.bf16.mxu0 0
          %860 = vmatpush1.bf16.msra.mxu0 0
          %861 = vmatprep.subr.bf16.mxu0 0
          %862 = vmatpush1.bf16.msra.mxu0 0
          %863 = vmatprep.subr.bf16.mxu0 0
          %864 = vmatpush1.bf16.msra.mxu0 0
          %865 = vmatprep.subr.bf16.mxu0 0
          %866 = vmatpush1.bf16.msra.mxu0 0
          %867 = vmatprep.subr.bf16.mxu0 0
          %868 = vmatpush1.bf16.msra.mxu0 0
          %869 = vmatprep.subr.bf16.mxu0 0
          %870 = vmatpush1.bf16.msra.mxu0 0
          %871 = vmatprep.subr.bf16.mxu0 0
          %872 = vmatpush1.bf16.msra.mxu0 0
          %873 = vmatprep.subr.bf16.mxu0 0
          %874 = vmatpush1.bf16.msra.mxu0 0
          %875 = vmatprep.subr.bf16.mxu0 0
          %876 = vmatpush1.bf16.msra.mxu0 0
          %877 = vmatprep.subr.bf16.mxu0 0
          %878 = vmatpush1.bf16.msra.mxu0 0
          %879 = vmatprep.mubr.bf16.mxu0 0
          %880 = vmatmul.mubr.bf16.gmra.mrb[0].mxu0 %v845
          %v881 = vpop.f32.mrb[0].mxu0
          %v882 = vadd.f32 0.0, %v881
          %v883 = vpop.f32.mrb[0].mxu0
          %v884 = vpop.f32.mrb[0].mxu0
          %v885 = vpop.f32.mrb[0].mxu0
          %886 = vdwg.mxu0
          %v887 = vld [vmem:[#allocation4] sm:$0x1]
          %vm888 = vcmask 195584
          %v889 = vsel %vm888, %v882, 0.0
          %v890 = vrot.slane %v889, 4
          %v891 = vadd.f32 %v889, %v890
          %v892 = vrot.slane %v891, 2
          %v893 = vadd.f32 %v891, %v892
          %v894 = vrot.slane %v893, 1
          %v895 = vadd.f32 %v893, %v894
          %v896 = vadd.f32 %v887, %v895
          %vm897 = vcmask 188416
          %898 = vst.msk [vmem:[#allocation4] sm:$0x1] %vm897, %v896
          %v899 = vld [vmem:[#allocation5] sm:$0x1]
          %v900 = vmul.f32 %v882, %v882
          %v901 = vsel %vm888, %v900, 0.0
          %v902 = vrot.slane %v901, 4
          %v903 = vadd.f32 %v901, %v902
          %v904 = vrot.slane %v903, 2
          %v905 = vadd.f32 %v903, %v904
          %v906 = vrot.slane %v905, 1
          %v907 = vadd.f32 %v905, %v906
          %v908 = vadd.f32 %v899, %v907
          %909 = vst.msk [vmem:[#allocation5] sm:$0x1] %vm897, %v908
        $region120: #{tpu_custom_call.1} parent=87 // pred_fallthru
          _
        // Predicated region
        $region121: #{tpu_custom_call.1} parent=87 // pred_check
          %p910 = pneg %p599
        $region122: #{tpu_custom_call.1} parent=87 // pred_check_branch
          %912 = sbr.rel (%p910) target = $region124
        $region123: #{tpu_custom_call.1} parent=87 // pred_region
          %v913 = vld [vmem:[%s562] sm:$0xf]
          %v914 = vld [vmem:[%s1] sm:$0xf]
          %v915 = vld [vmem:[%s1 + $0x4] sm:$0xf]
          %v918 = vunpack.c.l.b16 %v914
          %v919 = vunpack.c.l.b16 %v915
          %v920 = vpack.c.b16 %v919, %v918
          %vm922 = vcmask 130048
          %v924 = vsel %vm922, %v913, 0
          %926 = vmatprep.subr.bf16.mxu0 0
          %927 = vmatpush1.bf16.msra.mxu0 %v920
          %928 = vmatprep.subr.bf16.mxu0 0
          %929 = vmatpush1.bf16.msra.mxu0 0
          %930 = vmatprep.subr.bf16.mxu0 0
          %931 = vmatpush1.bf16.msra.mxu0 0
          %932 = vmatprep.subr.bf16.mxu0 0
          %933 = vmatpush1.bf16.msra.mxu0 0
          %934 = vmatprep.subr.bf16.mxu0 0
          %935 = vmatpush1.bf16.msra.mxu0 0
          %936 = vmatprep.subr.bf16.mxu0 0
          %937 = vmatpush1.bf16.msra.mxu0 0
          %938 = vmatprep.subr.bf16.mxu0 0
          %939 = vmatpush1.bf16.msra.mxu0 0
          %940 = vmatprep.subr.bf16.mxu0 0
          %941 = vmatpush1.bf16.msra.mxu0 0
          %942 = vmatprep.subr.bf16.mxu0 0
          %943 = vmatpush1.bf16.msra.mxu0 0
          %944 = vmatprep.subr.bf16.mxu0 0
          %945 = vmatpush1.bf16.msra.mxu0 0
          %946 = vmatprep.subr.bf16.mxu0 0
          %947 = vmatpush1.bf16.msra.mxu0 0
          %948 = vmatprep.subr.bf16.mxu0 0
          %949 = vmatpush1.bf16.msra.mxu0 0
          %950 = vmatprep.subr.bf16.mxu0 0
          %951 = vmatpush1.bf16.msra.mxu0 0
          %952 = vmatprep.subr.bf16.mxu0 0
          %953 = vmatpush1.bf16.msra.mxu0 0
          %954 = vmatprep.subr.bf16.mxu0 0
          %955 = vmatpush1.bf16.msra.mxu0 0
          %956 = vmatprep.subr.bf16.mxu0 0
          %957 = vmatpush1.bf16.msra.mxu0 0
          %958 = vmatprep.mubr.bf16.mxu0 0
          %959 = vmatmul.mubr.bf16.gmra.mrb[0].mxu0 %v924
          %v960 = vpop.f32.mrb[0].mxu0
          %v961 = vadd.f32 0.0, %v960
          %v962 = vpop.f32.mrb[0].mxu0
          %v963 = vpop.f32.mrb[0].mxu0
          %v964 = vpop.f32.mrb[0].mxu0
          %965 = vdwg.mxu0
          %v966 = vld [vmem:[#allocation2] sm:$0x1]
          %v968 = vlaneseq
          %v969 = vshrl.u32 %v968, 7
          %v970 = vsub.s32 0, %v969
          %v971 = vrot.slane %v966, %v970
          %v973 = vsub.f32 %v961, %v971
          %v974 = vld [vmem:[#allocation3] sm:$0x1]
          %v976 = vlaneseq
          %v977 = vshrl.u32 %v976, 7
          %v978 = vsub.s32 0, %v977
          %v979 = vrot.slane %v974, %v978
          %v981 = vmul.f32 %v973, %v979
          %v982 = vld [vmem:[%s2] sm:$0x1]
          %v984 = vlaneseq
          %v985 = vshrl.u32 %v984, 7
          %v986 = vsub.s32 0, %v985
          %v987 = vrot.slane %v982, %v986
          %v989 = vmul.f32 %v981, %v987
          %v990 = vld [vmem:[%s3] sm:$0x1]
          %v992 = vlaneseq
          %v993 = vshrl.u32 %v992, 7
          %v994 = vsub.s32 0, %v993
          %v995 = vrot.slane %v990, %v994
          %v997 = vadd.f32 %v989, %v995
          %v998 = vmax.f32 %v997, 0.0
          %v999 = vpack.c.bf16 %v998, %v998
          %v1000 = vld [vmem:[%s4] sm:$0xf]
          %v1001 = vld [vmem:[%s4 + $0x4] sm:$0xf]
          %v1002 = vld [vmem:[%s4 + $0x8] sm:$0xf]
          %v1003 = vld [vmem:[%s4 + $0xc] sm:$0xf]
          %v1004 = vld [vmem:[%s4 + $0x10] sm:$0xf]
          %v1005 = vld [vmem:[%s4 + $0x14] sm:$0xf]
          %v1012 = vunpack.c.l.b16 %v1000
          %v1013 = vunpack.c.l.b16 %v1001
          %v1014 = vunpack.c.l.b16 %v1002
          %v1015 = vunpack.c.l.b16 %v1003
          %v1016 = vunpack.c.l.b16 %v1004
          %v1017 = vunpack.c.l.b16 %v1005
          %v1018 = vpack.c.b16 %v1013, %v1012
          %v1019 = vpack.c.b16 %v1015, %v1014
          %v1020 = vpack.c.b16 %v1017, %v1016
          %vm1024 = vcmask 392192
          %v1026 = vsel %vm1024, %v999, 0
          %1028 = vmatprep.subr.bf16.mxu0 0
          %1029 = vmatpush1.bf16.msra.mxu0 %v1018
          %1030 = vmatprep.subr.bf16.mxu0 0
          %1031 = vmatpush1.bf16.msra.mxu0 %v1019
          %1032 = vmatprep.subr.bf16.mxu0 0
          %1033 = vmatpush1.bf16.msra.mxu0 %v1020
          %1034 = vmatprep.subr.bf16.mxu0 0
          %1035 = vmatpush1.bf16.msra.mxu0 0
          %1036 = vmatprep.subr.bf16.mxu0 0
          %1037 = vmatpush1.bf16.msra.mxu0 0
          %1038 = vmatprep.subr.bf16.mxu0 0
          %1039 = vmatpush1.bf16.msra.mxu0 0
          %1040 = vmatprep.subr.bf16.mxu0 0
          %1041 = vmatpush1.bf16.msra.mxu0 0
          %1042 = vmatprep.subr.bf16.mxu0 0
          %1043 = vmatpush1.bf16.msra.mxu0 0
          %1044 = vmatprep.subr.bf16.mxu0 0
          %1045 = vmatpush1.bf16.msra.mxu0 0
          %1046 = vmatprep.subr.bf16.mxu0 0
          %1047 = vmatpush1.bf16.msra.mxu0 0
          %1048 = vmatprep.subr.bf16.mxu0 0
          %1049 = vmatpush1.bf16.msra.mxu0 0
          %1050 = vmatprep.subr.bf16.mxu0 0
          %1051 = vmatpush1.bf16.msra.mxu0 0
          %1052 = vmatprep.subr.bf16.mxu0 0
          %1053 = vmatpush1.bf16.msra.mxu0 0
          %1054 = vmatprep.subr.bf16.mxu0 0
          %1055 = vmatpush1.bf16.msra.mxu0 0
          %1056 = vmatprep.subr.bf16.mxu0 0
          %1057 = vmatpush1.bf16.msra.mxu0 0
          %1058 = vmatprep.subr.bf16.mxu0 0
          %1059 = vmatpush1.bf16.msra.mxu0 0
          %1060 = vmatprep.mubr.bf16.mxu0 0
          %1061 = vmatmul.mubr.bf16.gmra.mrb[0].mxu0 %v1026
          %v1062 = vpop.f32.mrb[0].mxu0
          %v1063 = vadd.f32 0.0, %v1062
          %v1064 = vpop.f32.mrb[0].mxu0
          %v1065 = vpop.f32.mrb[0].mxu0
          %v1066 = vpop.f32.mrb[0].mxu0
          %1067 = vdwg.mxu0
          %v1068 = vld [vmem:[#allocation4] sm:$0x1]
          %v1070 = vlaneseq
          %v1071 = vshrl.u32 %v1070, 7
          %v1072 = vsub.s32 0, %v1071
          %v1073 = vrot.slane %v1068, %v1072
          %v1075 = vsub.f32 %v1063, %v1073
          %v1076 = vld [vmem:[#allocation5] sm:$0x1]
          %v1078 = vlaneseq
          %v1079 = vshrl.u32 %v1078, 7
          %v1080 = vsub.s32 0, %v1079
          %v1081 = vrot.slane %v1076, %v1080
          %v1083 = vmul.f32 %v1075, %v1081
          %v1084 = vld [vmem:[%s5] sm:$0x1]
          %v1086 = vlaneseq
          %v1087 = vshrl.u32 %v1086, 7
          %v1088 = vsub.s32 0, %v1087
          %v1089 = vrot.slane %v1084, %v1088
          %v1091 = vmul.f32 %v1083, %v1089
          %v1092 = vld [vmem:[%s6] sm:$0x1]
          %v1094 = vlaneseq
          %v1095 = vshrl.u32 %v1094, 7
          %v1096 = vsub.s32 0, %v1095
          %v1097 = vrot.slane %v1092, %v1096
          %v1099 = vadd.f32 %v1091, %v1097
          %v1100 = vmax.f32 %v1099, 0.0
          %v1101 = vpack.c.bf16 %v1100, %v1100
          %v1102 = vld [vmem:[%s7] sm:$0xf]
          %v1103 = vld [vmem:[%s7 + $0x4] sm:$0xf]
          %v1104 = vld [vmem:[%s7 + $0x8] sm:$0xf]
          %v1108 = vunpack.c.l.b16 %v1102
          %v1109 = vunpack.c.l.b16 %v1103
          %v1110 = vunpack.c.l.b16 %v1104
          %v1111 = vpack.c.b16 %v1109, %v1108
          %v1112 = vpack.c.b16 %v1110, %v1110
          %vm1114 = vcmask 195584
          %v1116 = vsel %vm1114, %v1101, 0
          %vm1118 = vcmask 1043456
          %v1120 = vsel %vm1118, %v1112, 0
          %1122 = vmatprep.subr.bf16.mxu0 0
          %1123 = vmatpush1.bf16.msra.mxu0 %v1111
          %1124 = vmatprep.subr.bf16.mxu0 0
          %1125 = vmatpush1.bf16.msra.mxu0 %v1120
          %1126 = vmatprep.subr.bf16.mxu0 0
          %1127 = vmatpush1.bf16.msra.mxu0 0
          %1128 = vmatprep.subr.bf16.mxu0 0
          %1129 = vmatpush1.bf16.msra.mxu0 0
          %1130 = vmatprep.subr.bf16.mxu0 0
          %1131 = vmatpush1.bf16.msra.mxu0 0
          %1132 = vmatprep.subr.bf16.mxu0 0
          %1133 = vmatpush1.bf16.msra.mxu0 0
          %1134 = vmatprep.subr.bf16.mxu0 0
          %1135 = vmatpush1.bf16.msra.mxu0 0
          %1136 = vmatprep.subr.bf16.mxu0 0
          %1137 = vmatpush1.bf16.msra.mxu0 0
          %1138 = vmatprep.subr.bf16.mxu0 0
          %1139 = vmatpush1.bf16.msra.mxu0 0
          %1140 = vmatprep.subr.bf16.mxu0 0
          %1141 = vmatpush1.bf16.msra.mxu0 0
          %1142 = vmatprep.subr.bf16.mxu0 0
          %1143 = vmatpush1.bf16.msra.mxu0 0
          %1144 = vmatprep.subr.bf16.mxu0 0
          %1145 = vmatpush1.bf16.msra.mxu0 0
          %1146 = vmatprep.subr.bf16.mxu0 0
          %1147 = vmatpush1.bf16.msra.mxu0 0
          %1148 = vmatprep.subr.bf16.mxu0 0
          %1149 = vmatpush1.bf16.msra.mxu0 0
          %1150 = vmatprep.subr.bf16.mxu0 0
          %1151 = vmatpush1.bf16.msra.mxu0 0
          %1152 = vmatprep.subr.bf16.mxu0 0
          %1153 = vmatpush1.bf16.msra.mxu0 0
          %1154 = vmatprep.mubr.bf16.mxu0 0
          %1155 = vmatmul.mubr.bf16.gmra.mrb[0].mxu0 %v1116
          %v1156 = vpop.f32.mrb[0].mxu0
          %v1157 = vadd.f32 0.0, %v1156
          %v1158 = vpop.f32.mrb[0].mxu0
          %v1159 = vpop.f32.mrb[0].mxu0
          %v1160 = vpop.f32.mrb[0].mxu0
          %1161 = vdwg.mxu0
          %v1162 = vld [vmem:[#allocation6] sm:$0x1]
          %vm1163 = vcmask 97280
          %v1164 = vsel %vm1163, %v1157, 0.0
          %v1165 = vrot.slane %v1164, 4
          %v1166 = vadd.f32 %v1164, %v1165
          %v1167 = vrot.slane %v1166, 2
          %v1168 = vadd.f32 %v1166, %v1167
          %v1169 = vrot.slane %v1168, 1
          %v1170 = vadd.f32 %v1168, %v1169
          %v1171 = vadd.f32 %v1162, %v1170
          %vm1172 = vcmask 90112
          %1173 = vst.msk [vmem:[#allocation6] sm:$0x1] %vm1172, %v1171
          %v1174 = vld [vmem:[#allocation7] sm:$0x1]
          %v1175 = vmul.f32 %v1157, %v1157
          %v1176 = vsel %vm1163, %v1175, 0.0
          %v1177 = vrot.slane %v1176, 4
          %v1178 = vadd.f32 %v1176, %v1177
          %v1179 = vrot.slane %v1178, 2
          %v1180 = vadd.f32 %v1178, %v1179
          %v1181 = vrot.slane %v1180, 1
          %v1182 = vadd.f32 %v1180, %v1181
          %v1183 = vadd.f32 %v1174, %v1182
          %1184 = vst.msk [vmem:[#allocation7] sm:$0x1] %vm1172, %v1183
        $region124: #{tpu_custom_call.1} parent=87 // pred_fallthru
          _
        // Predicated region
        $region125: #{tpu_custom_call.1} parent=87 // pred_check
          %p1185 = pneg %p616
        $region126: #{tpu_custom_call.1} parent=87 // pred_check_branch
          %1187 = sbr.rel (%p1185) target = $region128
        $region127: #{tpu_custom_call.1} parent=87 // pred_region
          %v1188 = vld [vmem:[%s562] sm:$0xf]
          %v1189 = vld [vmem:[%s1] sm:$0xf]
          %v1190 = vld [vmem:[%s1 + $0x4] sm:$0xf]
          %v1193 = vunpack.c.l.b16 %v1189
          %v1194 = vunpack.c.l.b16 %v1190
          %v1195 = vpack.c.b16 %v1194, %v1193
          %vm1197 = vcmask 130048
          %v1199 = vsel %vm1197, %v1188, 0
          %1201 = vmatprep.subr.bf16.mxu0 0
          %1202 = vmatpush1.bf16.msra.mxu0 %v1195
          %1203 = vmatprep.subr.bf16.mxu0 0
          %1204 = vmatpush1.bf16.msra.mxu0 0
          %1205 = vmatprep.subr.bf16.mxu0 0
          %1206 = vmatpush1.bf16.msra.mxu0 0
          %1207 = vmatprep.subr.bf16.mxu0 0
          %1208 = vmatpush1.bf16.msra.mxu0 0
          %1209 = vmatprep.subr.bf16.mxu0 0
          %1210 = vmatpush1.bf16.msra.mxu0 0
          %1211 = vmatprep.subr.bf16.mxu0 0
          %1212 = vmatpush1.bf16.msra.mxu0 0
          %1213 = vmatprep.subr.bf16.mxu0 0
          %1214 = vmatpush1.bf16.msra.mxu0 0
          %1215 = vmatprep.subr.bf16.mxu0 0
          %1216 = vmatpush1.bf16.msra.mxu0 0
          %1217 = vmatprep.subr.bf16.mxu0 0
          %1218 = vmatpush1.bf16.msra.mxu0 0
          %1219 = vmatprep.subr.bf16.mxu0 0
          %1220 = vmatpush1.bf16.msra.mxu0 0
          %1221 = vmatprep.subr.bf16.mxu0 0
          %1222 = vmatpush1.bf16.msra.mxu0 0
          %1223 = vmatprep.subr.bf16.mxu0 0
          %1224 = vmatpush1.bf16.msra.mxu0 0
          %1225 = vmatprep.subr.bf16.mxu0 0
          %1226 = vmatpush1.bf16.msra.mxu0 0
          %1227 = vmatprep.subr.bf16.mxu0 0
          %1228 = vmatpush1.bf16.msra.mxu0 0
          %1229 = vmatprep.subr.bf16.mxu0 0
          %1230 = vmatpush1.bf16.msra.mxu0 0
          %1231 = vmatprep.subr.bf16.mxu0 0
          %1232 = vmatpush1.bf16.msra.mxu0 0
          %1233 = vmatprep.mubr.bf16.mxu0 0
          %1234 = vmatmul.mubr.bf16.gmra.mrb[0].mxu0 %v1199
          %v1235 = vpop.f32.mrb[0].mxu0
          %v1236 = vadd.f32 0.0, %v1235
          %v1237 = vpop.f32.mrb[0].mxu0
          %v1238 = vpop.f32.mrb[0].mxu0
          %v1239 = vpop.f32.mrb[0].mxu0
          %1240 = vdwg.mxu0
          %v1241 = vld [vmem:[#allocation2] sm:$0x1]
          %v1243 = vlaneseq
          %v1244 = vshrl.u32 %v1243, 7
          %v1245 = vsub.s32 0, %v1244
          %v1246 = vrot.slane %v1241, %v1245
          %v1248 = vsub.f32 %v1236, %v1246
          %v1249 = vld [vmem:[#allocation3] sm:$0x1]
          %v1251 = vlaneseq
          %v1252 = vshrl.u32 %v1251, 7
          %v1253 = vsub.s32 0, %v1252
          %v1254 = vrot.slane %v1249, %v1253
          %v1256 = vmul.f32 %v1248, %v1254
          %v1257 = vld [vmem:[%s2] sm:$0x1]
          %v1259 = vlaneseq
          %v1260 = vshrl.u32 %v1259, 7
          %v1261 = vsub.s32 0, %v1260
          %v1262 = vrot.slane %v1257, %v1261
          %v1264 = vmul.f32 %v1256, %v1262
          %v1265 = vld [vmem:[%s3] sm:$0x1]
          %v1267 = vlaneseq
          %v1268 = vshrl.u32 %v1267, 7
          %v1269 = vsub.s32 0, %v1268
          %v1270 = vrot.slane %v1265, %v1269
          %v1272 = vadd.f32 %v1264, %v1270
          %v1273 = vmax.f32 %v1272, 0.0
          %v1274 = vpack.c.bf16 %v1273, %v1273
          %v1275 = vld [vmem:[%s4] sm:$0xf]
          %v1276 = vld [vmem:[%s4 + $0x4] sm:$0xf]
          %v1277 = vld [vmem:[%s4 + $0x8] sm:$0xf]
          %v1278 = vld [vmem:[%s4 + $0xc] sm:$0xf]
          %v1279 = vld [vmem:[%s4 + $0x10] sm:$0xf]
          %v1280 = vld [vmem:[%s4 + $0x14] sm:$0xf]
          %v1287 = vunpack.c.l.b16 %v1275
          %v1288 = vunpack.c.l.b16 %v1276
          %v1289 = vunpack.c.l.b16 %v1277
          %v1290 = vunpack.c.l.b16 %v1278
          %v1291 = vunpack.c.l.b16 %v1279
          %v1292 = vunpack.c.l.b16 %v1280
          %v1293 = vpack.c.b16 %v1288, %v1287
          %v1294 = vpack.c.b16 %v1290, %v1289
          %v1295 = vpack.c.b16 %v1292, %v1291
          %vm1299 = vcmask 392192
          %v1301 = vsel %vm1299, %v1274, 0
          %1303 = vmatprep.subr.bf16.mxu0 0
          %1304 = vmatpush1.bf16.msra.mxu0 %v1293
          %1305 = vmatprep.subr.bf16.mxu0 0
          %1306 = vmatpush1.bf16.msra.mxu0 %v1294
          %1307 = vmatprep.subr.bf16.mxu0 0
          %1308 = vmatpush1.bf16.msra.mxu0 %v1295
          %1309 = vmatprep.subr.bf16.mxu0 0
          %1310 = vmatpush1.bf16.msra.mxu0 0
          %1311 = vmatprep.subr.bf16.mxu0 0
          %1312 = vmatpush1.bf16.msra.mxu0 0
          %1313 = vmatprep.subr.bf16.mxu0 0
          %1314 = vmatpush1.bf16.msra.mxu0 0
          %1315 = vmatprep.subr.bf16.mxu0 0
          %1316 = vmatpush1.bf16.msra.mxu0 0
          %1317 = vmatprep.subr.bf16.mxu0 0
          %1318 = vmatpush1.bf16.msra.mxu0 0
          %1319 = vmatprep.subr.bf16.mxu0 0
          %1320 = vmatpush1.bf16.msra.mxu0 0
          %1321 = vmatprep.subr.bf16.mxu0 0
          %1322 = vmatpush1.bf16.msra.mxu0 0
          %1323 = vmatprep.subr.bf16.mxu0 0
          %1324 = vmatpush1.bf16.msra.mxu0 0
          %1325 = vmatprep.subr.bf16.mxu0 0
          %1326 = vmatpush1.bf16.msra.mxu0 0
          %1327 = vmatprep.subr.bf16.mxu0 0
          %1328 = vmatpush1.bf16.msra.mxu0 0
          %1329 = vmatprep.subr.bf16.mxu0 0
          %1330 = vmatpush1.bf16.msra.mxu0 0
          %1331 = vmatprep.subr.bf16.mxu0 0
          %1332 = vmatpush1.bf16.msra.mxu0 0
          %1333 = vmatprep.subr.bf16.mxu0 0
          %1334 = vmatpush1.bf16.msra.mxu0 0
          %1335 = vmatprep.mubr.bf16.mxu0 0
          %1336 = vmatmul.mubr.bf16.gmra.mrb[0].mxu0 %v1301
          %v1337 = vpop.f32.mrb[0].mxu0
          %v1338 = vadd.f32 0.0, %v1337
          %v1339 = vpop.f32.mrb[0].mxu0
          %v1340 = vpop.f32.mrb[0].mxu0
          %v1341 = vpop.f32.mrb[0].mxu0
          %1342 = vdwg.mxu0
          %v1343 = vld [vmem:[#allocation4] sm:$0x1]
          %v1345 = vlaneseq
          %v1346 = vshrl.u32 %v1345, 7
          %v1347 = vsub.s32 0, %v1346
          %v1348 = vrot.slane %v1343, %v1347
          %v1350 = vsub.f32 %v1338, %v1348
          %v1351 = vld [vmem:[#allocation5] sm:$0x1]
          %v1353 = vlaneseq
          %v1354 = vshrl.u32 %v1353, 7
          %v1355 = vsub.s32 0, %v1354
          %v1356 = vrot.slane %v1351, %v1355
          %v1358 = vmul.f32 %v1350, %v1356
          %v1359 = vld [vmem:[%s5] sm:$0x1]
          %v1361 = vlaneseq
          %v1362 = vshrl.u32 %v1361, 7
          %v1363 = vsub.s32 0, %v1362
          %v1364 = vrot.slane %v1359, %v1363
          %v1366 = vmul.f32 %v1358, %v1364
          %v1367 = vld [vmem:[%s6] sm:$0x1]
          %v1369 = vlaneseq
          %v1370 = vshrl.u32 %v1369, 7
          %v1371 = vsub.s32 0, %v1370
          %v1372 = vrot.slane %v1367, %v1371
          %v1374 = vadd.f32 %v1366, %v1372
          %v1375 = vmax.f32 %v1374, 0.0
          %v1376 = vpack.c.bf16 %v1375, %v1375
          %v1377 = vld [vmem:[%s7] sm:$0xf]
          %v1378 = vld [vmem:[%s7 + $0x4] sm:$0xf]
          %v1379 = vld [vmem:[%s7 + $0x8] sm:$0xf]
          %v1383 = vunpack.c.l.b16 %v1377
          %v1384 = vunpack.c.l.b16 %v1378
          %v1385 = vunpack.c.l.b16 %v1379
          %v1386 = vpack.c.b16 %v1384, %v1383
          %v1387 = vpack.c.b16 %v1385, %v1385
          %vm1389 = vcmask 195584
          %v1391 = vsel %vm1389, %v1376, 0
          %vm1393 = vcmask 1043456
          %v1395 = vsel %vm1393, %v1387, 0
          %1397 = vmatprep.subr.bf16.mxu0 0
          %1398 = vmatpush1.bf16.msra.mxu0 %v1386
          %1399 = vmatprep.subr.bf16.mxu0 0
          %1400 = vmatpush1.bf16.msra.mxu0 %v1395
          %1401 = vmatprep.subr.bf16.mxu0 0
          %1402 = vmatpush1.bf16.msra.mxu0 0
          %1403 = vmatprep.subr.bf16.mxu0 0
          %1404 = vmatpush1.bf16.msra.mxu0 0
          %1405 = vmatprep.subr.bf16.mxu0 0
          %1406 = vmatpush1.bf16.msra.mxu0 0
          %1407 = vmatprep.subr.bf16.mxu0 0
          %1408 = vmatpush1.bf16.msra.mxu0 0
          %1409 = vmatprep.subr.bf16.mxu0 0
          %1410 = vmatpush1.bf16.msra.mxu0 0
          %1411 = vmatprep.subr.bf16.mxu0 0
          %1412 = vmatpush1.bf16.msra.mxu0 0
          %1413 = vmatprep.subr.bf16.mxu0 0
          %1414 = vmatpush1.bf16.msra.mxu0 0
          %1415 = vmatprep.subr.bf16.mxu0 0
          %1416 = vmatpush1.bf16.msra.mxu0 0
          %1417 = vmatprep.subr.bf16.mxu0 0
          %1418 = vmatpush1.bf16.msra.mxu0 0
          %1419 = vmatprep.subr.bf16.mxu0 0
          %1420 = vmatpush1.bf16.msra.mxu0 0
          %1421 = vmatprep.subr.bf16.mxu0 0
          %1422 = vmatpush1.bf16.msra.mxu0 0
          %1423 = vmatprep.subr.bf16.mxu0 0
          %1424 = vmatpush1.bf16.msra.mxu0 0
          %1425 = vmatprep.subr.bf16.mxu0 0
          %1426 = vmatpush1.bf16.msra.mxu0 0
          %1427 = vmatprep.subr.bf16.mxu0 0
          %1428 = vmatpush1.bf16.msra.mxu0 0
          %1429 = vmatprep.mubr.bf16.mxu0 0
          %1430 = vmatmul.mubr.bf16.gmra.mrb[0].mxu0 %v1391
          %v1431 = vpop.f32.mrb[0].mxu0
          %v1432 = vadd.f32 0.0, %v1431
          %v1433 = vpop.f32.mrb[0].mxu0
          %v1434 = vpop.f32.mrb[0].mxu0
          %v1435 = vpop.f32.mrb[0].mxu0
          %1436 = vdwg.mxu0
          %v1437 = vld [vmem:[#allocation6] sm:$0x1]
          %v1439 = vlaneseq
          %v1440 = vshrl.u32 %v1439, 7
          %v1441 = vsub.s32 0, %v1440
          %v1442 = vrot.slane %v1437, %v1441
          %v1444 = vsub.f32 %v1432, %v1442
          %v1445 = vld [vmem:[#allocation7] sm:$0x1]
          %v1447 = vlaneseq
          %v1448 = vshrl.u32 %v1447, 7
          %v1449 = vsub.s32 0, %v1448
          %v1450 = vrot.slane %v1445, %v1449
          %v1452 = vmul.f32 %v1444, %v1450
          %v1453 = vld [vmem:[%s8] sm:$0x1]
          %v1455 = vlaneseq
          %v1456 = vshrl.u32 %v1455, 7
          %v1457 = vsub.s32 0, %v1456
          %v1458 = vrot.slane %v1453, %v1457
          %v1460 = vmul.f32 %v1452, %v1458
          %v1461 = vld [vmem:[%s9] sm:$0x1]
          %v1463 = vlaneseq
          %v1464 = vshrl.u32 %v1463, 7
          %v1465 = vsub.s32 0, %v1464
          %v1466 = vrot.slane %v1461, %v1465
          %v1468 = vadd.f32 %v1460, %v1466
          %v1469 = vmax.f32 %v1468, 0.0
          %v1470 = vpack.c.bf16 %v1469, %v1469
          %v1471 = vld [vmem:[%s10] sm:$0xf]
          %v1472 = vld [vmem:[%s10 + $0x4] sm:$0x3]
          %v1473 = vld [vmem:[%s11] sm:$0x1]
          %v1475 = vlaneseq
          %v1476 = vshrl.u32 %v1475, 7
          %v1477 = vsub.s32 0, %v1476
          %v1478 = vrot.slane %v1473, %v1477
          %v1482 = vunpack.c.l.b16 %v1471
          %v1483 = vunpack.c.l.b16 %v1472
          %v1484 = vpack.c.b16 %v1483, %v1482
          %vm1485 = vcmask 97280
          %v1487 = vsel %vm1485, %v1470, 0
          %vm1489 = vcmask 1045504
          %v1491 = vsel %vm1489, %v1484, 0
          %1493 = vmatprep.subr.bf16.mxu0 0
          %1494 = vmatpush1.bf16.msra.mxu0 %v1491
          %1495 = vmatprep.subr.bf16.mxu0 0
          %1496 = vmatpush1.bf16.msra.mxu0 0
          %1497 = vmatprep.subr.bf16.mxu0 0
          %1498 = vmatpush1.bf16.msra.mxu0 0
          %1499 = vmatprep.subr.bf16.mxu0 0
          %1500 = vmatpush1.bf16.msra.mxu0 0
          %1501 = vmatprep.subr.bf16.mxu0 0
          %1502 = vmatpush1.bf16.msra.mxu0 0
          %1503 = vmatprep.subr.bf16.mxu0 0
          %1504 = vmatpush1.bf16.msra.mxu0 0
          %1505 = vmatprep.subr.bf16.mxu0 0
          %1506 = vmatpush1.bf16.msra.mxu0 0
          %1507 = vmatprep.subr.bf16.mxu0 0
          %1508 = vmatpush1.bf16.msra.mxu0 0
          %1509 = vmatprep.subr.bf16.mxu0 0
          %1510 = vmatpush1.bf16.msra.mxu0 0
          %1511 = vmatprep.subr.bf16.mxu0 0
          %1512 = vmatpush1.bf16.msra.mxu0 0
          %1513 = vmatprep.subr.bf16.mxu0 0
          %1514 = vmatpush1.bf16.msra.mxu0 0
          %1515 = vmatprep.subr.bf16.mxu0 0
          %1516 = vmatpush1.bf16.msra.mxu0 0
          %1517 = vmatprep.subr.bf16.mxu0 0
          %1518 = vmatpush1.bf16.msra.mxu0 0
          %1519 = vmatprep.subr.bf16.mxu0 0
          %1520 = vmatpush1.bf16.msra.mxu0 0
          %1521 = vmatprep.subr.bf16.mxu0 0
          %1522 = vmatpush1.bf16.msra.mxu0 0
          %1523 = vmatprep.subr.bf16.mxu0 0
          %1524 = vmatpush1.bf16.msra.mxu0 0
          %1525 = vmatprep.mubr.bf16.mxu0 0
          %1526 = vmatmul.mubr.bf16.gmra.mrb[0].mxu0 %v1487
          %v1527 = vpop.f32.mrb[0].mxu0
          %v1528 = vadd.f32 %v1478, %v1527
          %v1529 = vpop.f32.mrb[0].mxu0
          %v1530 = vpop.f32.mrb[0].mxu0
          %v1531 = vpop.f32.mrb[0].mxu0
          %1532 = vdwg.mxu0
          %v1533 = vld [vmem:[#allocation8] sm:$0x1]
          %vm1534 = vcmask 64512
          %v1535 = vsel %vm1534, %v1528, 0.0
          %v1536 = vrot.slane %v1535, 4
          %v1537 = vadd.f32 %v1535, %v1536
          %v1538 = vrot.slane %v1537, 2
          %v1539 = vadd.f32 %v1537, %v1538
          %v1540 = vrot.slane %v1539, 1
          %v1541 = vadd.f32 %v1539, %v1540
          %v1542 = vadd.f32 %v1533, %v1541
          %vm1543 = vcmask 57344
          %1544 = vst.msk [vmem:[#allocation8] sm:$0x1] %vm1543, %v1542
          %v1545 = vld [vmem:[#allocation9] sm:$0x1]
          %v1546 = vmul.f32 %v1528, %v1528
          %v1547 = vsel %vm1534, %v1546, 0.0
          %v1548 = vrot.slane %v1547, 4
          %v1549 = vadd.f32 %v1547, %v1548
          %v1550 = vrot.slane %v1549, 2
          %v1551 = vadd.f32 %v1549, %v1550
          %v1552 = vrot.slane %v1551, 1
          %v1553 = vadd.f32 %v1551, %v1552
          %v1554 = vadd.f32 %v1545, %v1553
          %1555 = vst.msk [vmem:[#allocation9] sm:$0x1] %vm1543, %v1554
        $region128: #{tpu_custom_call.1} parent=87 // pred_fallthru
          _
        // Predicated region
        $region129: #{tpu_custom_call.1} parent=87 // pred_check
          %p1556 = pneg %p633
        $region130: #{tpu_custom_call.1} parent=87 // pred_check_branch
          %1558 = sbr.rel (%p1556) target = $region132
        $region131: #{tpu_custom_call.1} parent=87 // pred_region
          %v1559 = vld [vmem:[%s562] sm:$0xf]
          %v1560 = vld [vmem:[%s1] sm:$0xf]
          %v1561 = vld [vmem:[%s1 + $0x4] sm:$0xf]
          %v1564 = vunpack.c.l.b16 %v1560
          %v1565 = vunpack.c.l.b16 %v1561
          %v1566 = vpack.c.b16 %v1565, %v1564
          %vm1568 = vcmask 130048
          %v1570 = vsel %vm1568, %v1559, 0
          %1572 = vmatprep.subr.bf16.mxu0 0
          %1573 = vmatpush1.bf16.msra.mxu0 %v1566
          %1574 = vmatprep.subr.bf16.mxu0 0
          %1575 = vmatpush1.bf16.msra.mxu0 0
          %1576 = vmatprep.subr.bf16.mxu0 0
          %1577 = vmatpush1.bf16.msra.mxu0 0
          %1578 = vmatprep.subr.bf16.mxu0 0
          %1579 = vmatpush1.bf16.msra.mxu0 0
          %1580 = vmatprep.subr.bf16.mxu0 0
          %1581 = vmatpush1.bf16.msra.mxu0 0
          %1582 = vmatprep.subr.bf16.mxu0 0
          %1583 = vmatpush1.bf16.msra.mxu0 0
          %1584 = vmatprep.subr.bf16.mxu0 0
          %1585 = vmatpush1.bf16.msra.mxu0 0
          %1586 = vmatprep.subr.bf16.mxu0 0
          %1587 = vmatpush1.bf16.msra.mxu0 0
          %1588 = vmatprep.subr.bf16.mxu0 0
          %1589 = vmatpush1.bf16.msra.mxu0 0
          %1590 = vmatprep.subr.bf16.mxu0 0
          %1591 = vmatpush1.bf16.msra.mxu0 0
          %1592 = vmatprep.subr.bf16.mxu0 0
          %1593 = vmatpush1.bf16.msra.mxu0 0
          %1594 = vmatprep.subr.bf16.mxu0 0
          %1595 = vmatpush1.bf16.msra.mxu0 0
          %1596 = vmatprep.subr.bf16.mxu0 0
          %1597 = vmatpush1.bf16.msra.mxu0 0
          %1598 = vmatprep.subr.bf16.mxu0 0
          %1599 = vmatpush1.bf16.msra.mxu0 0
          %1600 = vmatprep.subr.bf16.mxu0 0
          %1601 = vmatpush1.bf16.msra.mxu0 0
          %1602 = vmatprep.subr.bf16.mxu0 0
          %1603 = vmatpush1.bf16.msra.mxu0 0
          %1604 = vmatprep.mubr.bf16.mxu0 0
          %1605 = vmatmul.mubr.bf16.gmra.mrb[0].mxu0 %v1570
          %v1606 = vpop.f32.mrb[0].mxu0
          %v1607 = vadd.f32 0.0, %v1606
          %v1608 = vpop.f32.mrb[0].mxu0
          %v1609 = vpop.f32.mrb[0].mxu0
          %v1610 = vpop.f32.mrb[0].mxu0
          %1611 = vdwg.mxu0
          %v1612 = vld [vmem:[#allocation2] sm:$0x1]
          %v1614 = vlaneseq
          %v1615 = vshrl.u32 %v1614, 7
          %v1616 = vsub.s32 0, %v1615
          %v1617 = vrot.slane %v1612, %v1616
          %v1619 = vsub.f32 %v1607, %v1617
          %v1620 = vld [vmem:[#allocation3] sm:$0x1]
          %v1622 = vlaneseq
          %v1623 = vshrl.u32 %v1622, 7
          %v1624 = vsub.s32 0, %v1623
          %v1625 = vrot.slane %v1620, %v1624
          %v1627 = vmul.f32 %v1619, %v1625
          %v1628 = vld [vmem:[%s2] sm:$0x1]
          %v1630 = vlaneseq
          %v1631 = vshrl.u32 %v1630, 7
          %v1632 = vsub.s32 0, %v1631
          %v1633 = vrot.slane %v1628, %v1632
          %v1635 = vmul.f32 %v1627, %v1633
          %v1636 = vld [vmem:[%s3] sm:$0x1]
          %v1638 = vlaneseq
          %v1639 = vshrl.u32 %v1638, 7
          %v1640 = vsub.s32 0, %v1639
          %v1641 = vrot.slane %v1636, %v1640
          %v1643 = vadd.f32 %v1635, %v1641
          %v1644 = vmax.f32 %v1643, 0.0
          %v1645 = vpack.c.bf16 %v1644, %v1644
          %v1646 = vld [vmem:[%s4] sm:$0xf]
          %v1647 = vld [vmem:[%s4 + $0x4] sm:$0xf]
          %v1648 = vld [vmem:[%s4 + $0x8] sm:$0xf]
          %v1649 = vld [vmem:[%s4 + $0xc] sm:$0xf]
          %v1650 = vld [vmem:[%s4 + $0x10] sm:$0xf]
          %v1651 = vld [vmem:[%s4 + $0x14] sm:$0xf]
          %v1658 = vunpack.c.l.b16 %v1646
          %v1659 = vunpack.c.l.b16 %v1647
          %v1660 = vunpack.c.l.b16 %v1648
          %v1661 = vunpack.c.l.b16 %v1649
          %v1662 = vunpack.c.l.b16 %v1650
          %v1663 = vunpack.c.l.b16 %v1651
          %v1664 = vpack.c.b16 %v1659, %v1658
          %v1665 = vpack.c.b16 %v1661, %v1660
          %v1666 = vpack.c.b16 %v1663, %v1662
          %vm1670 = vcmask 392192
          %v1672 = vsel %vm1670, %v1645, 0
          %1674 = vmatprep.subr.bf16.mxu0 0
          %1675 = vmatpush1.bf16.msra.mxu0 %v1664
          %1676 = vmatprep.subr.bf16.mxu0 0
          %1677 = vmatpush1.bf16.msra.mxu0 %v1665
          %1678 = vmatprep.subr.bf16.mxu0 0
          %1679 = vmatpush1.bf16.msra.mxu0 %v1666
          %1680 = vmatprep.subr.bf16.mxu0 0
          %1681 = vmatpush1.bf16.msra.mxu0 0
          %1682 = vmatprep.subr.bf16.mxu0 0
          %1683 = vmatpush1.bf16.msra.mxu0 0
          %1684 = vmatprep.subr.bf16.mxu0 0
          %1685 = vmatpush1.bf16.msra.mxu0 0
          %1686 = vmatprep.subr.bf16.mxu0 0
          %1687 = vmatpush1.bf16.msra.mxu0 0
          %1688 = vmatprep.subr.bf16.mxu0 0
          %1689 = vmatpush1.bf16.msra.mxu0 0
          %1690 = vmatprep.subr.bf16.mxu0 0
          %1691 = vmatpush1.bf16.msra.mxu0 0
          %1692 = vmatprep.subr.bf16.mxu0 0
          %1693 = vmatpush1.bf16.msra.mxu0 0
          %1694 = vmatprep.subr.bf16.mxu0 0
          %1695 = vmatpush1.bf16.msra.mxu0 0
          %1696 = vmatprep.subr.bf16.mxu0 0
          %1697 = vmatpush1.bf16.msra.mxu0 0
          %1698 = vmatprep.subr.bf16.mxu0 0
          %1699 = vmatpush1.bf16.msra.mxu0 0
          %1700 = vmatprep.subr.bf16.mxu0 0
          %1701 = vmatpush1.bf16.msra.mxu0 0
          %1702 = vmatprep.subr.bf16.mxu0 0
          %1703 = vmatpush1.bf16.msra.mxu0 0
          %1704 = vmatprep.subr.bf16.mxu0 0
          %1705 = vmatpush1.bf16.msra.mxu0 0
          %1706 = vmatprep.mubr.bf16.mxu0 0
          %1707 = vmatmul.mubr.bf16.gmra.mrb[0].mxu0 %v1672
          %v1708 = vpop.f32.mrb[0].mxu0
          %v1709 = vadd.f32 0.0, %v1708
          %v1710 = vpop.f32.mrb[0].mxu0
          %v1711 = vpop.f32.mrb[0].mxu0
          %v1712 = vpop.f32.mrb[0].mxu0
          %1713 = vdwg.mxu0
          %v1714 = vld [vmem:[#allocation4] sm:$0x1]
          %v1716 = vlaneseq
          %v1717 = vshrl.u32 %v1716, 7
          %v1718 = vsub.s32 0, %v1717
          %v1719 = vrot.slane %v1714, %v1718
          %v1721 = vsub.f32 %v1709, %v1719
          %v1722 = vld [vmem:[#allocation5] sm:$0x1]
          %v1724 = vlaneseq
          %v1725 = vshrl.u32 %v1724, 7
          %v1726 = vsub.s32 0, %v1725
          %v1727 = vrot.slane %v1722, %v1726
          %v1729 = vmul.f32 %v1721, %v1727
          %v1730 = vld [vmem:[%s5] sm:$0x1]
          %v1732 = vlaneseq
          %v1733 = vshrl.u32 %v1732, 7
          %v1734 = vsub.s32 0, %v1733
          %v1735 = vrot.slane %v1730, %v1734
          %v1737 = vmul.f32 %v1729, %v1735
          %v1738 = vld [vmem:[%s6] sm:$0x1]
          %v1740 = vlaneseq
          %v1741 = vshrl.u32 %v1740, 7
          %v1742 = vsub.s32 0, %v1741
          %v1743 = vrot.slane %v1738, %v1742
          %v1745 = vadd.f32 %v1737, %v1743
          %v1746 = vmax.f32 %v1745, 0.0
          %v1747 = vpack.c.bf16 %v1746, %v1746
          %v1748 = vld [vmem:[%s7] sm:$0xf]
          %v1749 = vld [vmem:[%s7 + $0x4] sm:$0xf]
          %v1750 = vld [vmem:[%s7 + $0x8] sm:$0xf]
          %v1754 = vunpack.c.l.b16 %v1748
          %v1755 = vunpack.c.l.b16 %v1749
          %v1756 = vunpack.c.l.b16 %v1750
          %v1757 = vpack.c.b16 %v1755, %v1754
          %v1758 = vpack.c.b16 %v1756, %v1756
          %vm1760 = vcmask 195584
          %v1762 = vsel %vm1760, %v1747, 0
          %vm1764 = vcmask 1043456
          %v1766 = vsel %vm1764, %v1758, 0
          %1768 = vmatprep.subr.bf16.mxu0 0
          %1769 = vmatpush1.bf16.msra.mxu0 %v1757
          %1770 = vmatprep.subr.bf16.mxu0 0
          %1771 = vmatpush1.bf16.msra.mxu0 %v1766
          %1772 = vmatprep.subr.bf16.mxu0 0
          %1773 = vmatpush1.bf16.msra.mxu0 0
          %1774 = vmatprep.subr.bf16.mxu0 0
          %1775 = vmatpush1.bf16.msra.mxu0 0
          %1776 = vmatprep.subr.bf16.mxu0 0
          %1777 = vmatpush1.bf16.msra.mxu0 0
          %1778 = vmatprep.subr.bf16.mxu0 0
          %1779 = vmatpush1.bf16.msra.mxu0 0
          %1780 = vmatprep.subr.bf16.mxu0 0
          %1781 = vmatpush1.bf16.msra.mxu0 0
          %1782 = vmatprep.subr.bf16.mxu0 0
          %1783 = vmatpush1.bf16.msra.mxu0 0
          %1784 = vmatprep.subr.bf16.mxu0 0
          %1785 = vmatpush1.bf16.msra.mxu0 0
          %1786 = vmatprep.subr.bf16.mxu0 0
          %1787 = vmatpush1.bf16.msra.mxu0 0
          %1788 = vmatprep.subr.bf16.mxu0 0
          %1789 = vmatpush1.bf16.msra.mxu0 0
          %1790 = vmatprep.subr.bf16.mxu0 0
          %1791 = vmatpush1.bf16.msra.mxu0 0
          %1792 = vmatprep.subr.bf16.mxu0 0
          %1793 = vmatpush1.bf16.msra.mxu0 0
          %1794 = vmatprep.subr.bf16.mxu0 0
          %1795 = vmatpush1.bf16.msra.mxu0 0
          %1796 = vmatprep.subr.bf16.mxu0 0
          %1797 = vmatpush1.bf16.msra.mxu0 0
          %1798 = vmatprep.subr.bf16.mxu0 0
          %1799 = vmatpush1.bf16.msra.mxu0 0
          %1800 = vmatprep.mubr.bf16.mxu0 0
          %1801 = vmatmul.mubr.bf16.gmra.mrb[0].mxu0 %v1762
          %v1802 = vpop.f32.mrb[0].mxu0
          %v1803 = vadd.f32 0.0, %v1802
          %v1804 = vpop.f32.mrb[0].mxu0
          %v1805 = vpop.f32.mrb[0].mxu0
          %v1806 = vpop.f32.mrb[0].mxu0
          %1807 = vdwg.mxu0
          %v1808 = vld [vmem:[#allocation6] sm:$0x1]
          %v1810 = vlaneseq
          %v1811 = vshrl.u32 %v1810, 7
          %v1812 = vsub.s32 0, %v1811
          %v1813 = vrot.slane %v1808, %v1812
          %v1815 = vsub.f32 %v1803, %v1813
          %v1816 = vld [vmem:[#allocation7] sm:$0x1]
          %v1818 = vlaneseq
          %v1819 = vshrl.u32 %v1818, 7
          %v1820 = vsub.s32 0, %v1819
          %v1821 = vrot.slane %v1816, %v1820
          %v1823 = vmul.f32 %v1815, %v1821
          %v1824 = vld [vmem:[%s8] sm:$0x1]
          %v1826 = vlaneseq
          %v1827 = vshrl.u32 %v1826, 7
          %v1828 = vsub.s32 0, %v1827
          %v1829 = vrot.slane %v1824, %v1828
          %v1831 = vmul.f32 %v1823, %v1829
          %v1832 = vld [vmem:[%s9] sm:$0x1]
          %v1834 = vlaneseq
          %v1835 = vshrl.u32 %v1834, 7
          %v1836 = vsub.s32 0, %v1835
          %v1837 = vrot.slane %v1832, %v1836
          %v1839 = vadd.f32 %v1831, %v1837
          %v1840 = vmax.f32 %v1839, 0.0
          %v1841 = vpack.c.bf16 %v1840, %v1840
          %v1842 = vld [vmem:[%s10] sm:$0xf]
          %v1843 = vld [vmem:[%s10 + $0x4] sm:$0x3]
          %v1844 = vld [vmem:[%s11] sm:$0x1]
          %v1846 = vlaneseq
          %v1847 = vshrl.u32 %v1846, 7
          %v1848 = vsub.s32 0, %v1847
          %v1849 = vrot.slane %v1844, %v1848
          %v1853 = vunpack.c.l.b16 %v1842
          %v1854 = vunpack.c.l.b16 %v1843
          %v1855 = vpack.c.b16 %v1854, %v1853
          %vm1856 = vcmask 97280
          %v1858 = vsel %vm1856, %v1841, 0
          %vm1860 = vcmask 1045504
          %v1862 = vsel %vm1860, %v1855, 0
          %1864 = vmatprep.subr.bf16.mxu0 0
          %1865 = vmatpush1.bf16.msra.mxu0 %v1862
          %1866 = vmatprep.subr.bf16.mxu0 0
          %1867 = vmatpush1.bf16.msra.mxu0 0
          %1868 = vmatprep.subr.bf16.mxu0 0
          %1869 = vmatpush1.bf16.msra.mxu0 0
          %1870 = vmatprep.subr.bf16.mxu0 0
          %1871 = vmatpush1.bf16.msra.mxu0 0
          %1872 = vmatprep.subr.bf16.mxu0 0
          %1873 = vmatpush1.bf16.msra.mxu0 0
          %1874 = vmatprep.subr.bf16.mxu0 0
          %1875 = vmatpush1.bf16.msra.mxu0 0
          %1876 = vmatprep.subr.bf16.mxu0 0
          %1877 = vmatpush1.bf16.msra.mxu0 0
          %1878 = vmatprep.subr.bf16.mxu0 0
          %1879 = vmatpush1.bf16.msra.mxu0 0
          %1880 = vmatprep.subr.bf16.mxu0 0
          %1881 = vmatpush1.bf16.msra.mxu0 0
          %1882 = vmatprep.subr.bf16.mxu0 0
          %1883 = vmatpush1.bf16.msra.mxu0 0
          %1884 = vmatprep.subr.bf16.mxu0 0
          %1885 = vmatpush1.bf16.msra.mxu0 0
          %1886 = vmatprep.subr.bf16.mxu0 0
          %1887 = vmatpush1.bf16.msra.mxu0 0
          %1888 = vmatprep.subr.bf16.mxu0 0
          %1889 = vmatpush1.bf16.msra.mxu0 0
          %1890 = vmatprep.subr.bf16.mxu0 0
          %1891 = vmatpush1.bf16.msra.mxu0 0
          %1892 = vmatprep.subr.bf16.mxu0 0
          %1893 = vmatpush1.bf16.msra.mxu0 0
          %1894 = vmatprep.subr.bf16.mxu0 0
          %1895 = vmatpush1.bf16.msra.mxu0 0
          %1896 = vmatprep.mubr.bf16.mxu0 0
          %1897 = vmatmul.mubr.bf16.gmra.mrb[0].mxu0 %v1858
          %v1898 = vpop.f32.mrb[0].mxu0
          %v1899 = vadd.f32 %v1849, %v1898
          %v1900 = vpop.f32.mrb[0].mxu0
          %v1901 = vpop.f32.mrb[0].mxu0
          %v1902 = vpop.f32.mrb[0].mxu0
          %1903 = vdwg.mxu0
          %v1904 = vld [vmem:[#allocation8] sm:$0x1]
          %v1906 = vlaneseq
          %v1907 = vshrl.u32 %v1906, 7
          %v1908 = vsub.s32 0, %v1907
          %v1909 = vrot.slane %v1904, %v1908
          %v1911 = vsub.f32 %v1899, %v1909
          %v1912 = vld [vmem:[#allocation9] sm:$0x1]
          %v1914 = vlaneseq
          %v1915 = vshrl.u32 %v1914, 7
          %v1916 = vsub.s32 0, %v1915
          %v1917 = vrot.slane %v1912, %v1916
          %v1919 = vmul.f32 %v1911, %v1917
          %v1920 = vld [vmem:[%s12] sm:$0x1]
          %v1922 = vlaneseq
          %v1923 = vshrl.u32 %v1922, 7
          %v1924 = vsub.s32 0, %v1923
          %v1925 = vrot.slane %v1920, %v1924
          %v1927 = vmul.f32 %v1919, %v1925
          %v1928 = vld [vmem:[%s13] sm:$0x1]
          %v1930 = vlaneseq
          %v1931 = vshrl.u32 %v1930, 7
          %v1932 = vsub.s32 0, %v1931
          %v1933 = vrot.slane %v1928, %v1932
          %v1935 = vadd.f32 %v1927, %v1933
          %v1936 = vmax.f32 %v1935, 0.0
          %v1937 = vld [vmem:[%s14] sm:$0x1]
          %v1939 = vlaneseq
          %v1940 = vshrl.u32 %v1939, 7
          %v1941 = vsub.s32 0, %v1940
          %v1942 = vrot.slane %v1937, %v1941
          %v1944 = vmul.f32 %v1936, %v1942
          %vm1945 = vcmask 64512
          %v1946 = vsel %vm1945, %v1944, 0.0
          %1947 = vadd.xlane.f32.xlu0 %v1946
          %v1948 = vpop.xlane.xlu0 %1947
          %s1949 = sld [smem:[#allocation10]]
          %v1950 = vstv %s1949
          %v1951 = vadd.f32 %v1948, %v1950
          %v1952 = vld [vmem:[%s15] sm:$0x1]
          %v1954 = vlaneseq
          %v1955 = vshrl.u32 %v1954, 7
          %v1956 = vsub.s32 0, %v1955
          %v1957 = vrot.slane %v1952, %v1956
          %v1959 = vmul.f32 %v1936, %v1957
          %v1960 = vsel %vm1945, %v1959, 0.0
          %1961 = vadd.xlane.f32.xlu0 %v1960
          %v1962 = vpop.xlane.xlu0 %1961
          %s1963 = sld [smem:[#allocation10 + $0x1]]
          %v1964 = vstv %s1963
          %v1965 = vadd.f32 %v1962, %v1964
          %v1966 = vlaneseq
          %v1967 = vand.u32 %v1966, 127
          %vm1968 = vcmp.eq.s32.totalorder %v1967, 2
          %v1969 = vsel %vm1968, %v1951, %v1899
          %vm1970 = vcmp.eq.s32.totalorder %v1967, 3
          %v1971 = vsel %vm1970, %v1965, %v1969
          %1972 = vst.msk [vmem:[#allocation13] sm:$0xff] %vm1945, %v1971
        $region132: #{tpu_custom_call.1} parent=87 // pred_fallthru
          _
        // Predicated region
        $region133: #{tpu_custom_call.1} parent=87 // pred_check
          %p1973 = pneg %p422
        $region134: #{tpu_custom_call.1} parent=87 // pred_check_branch
          %1975 = sbr.rel (%p1973) target = $region136
        $region135: #{tpu_custom_call.1} parent=87 // pred_region
          %s1977 = ssub.s32 128, 128
          %1978 = vsyncadd [#allocation11], %s1977
          %s1979 = smul.addr %s35, 128
          %s1980 = scalar_lea.hbm %s17, %s1979
          %s1982 = sshll.u32 [#allocation13], 4
          %s1983 = int_to_ptr.vmem [resolvable:$true] %s1982
          %1985 = dma.vmem_to_hbm [thread:$0]  %s1983, 128, %s1980, [#allocation11]
        $region136: #{tpu_custom_call.1} parent=87 // pred_fallthru
          _
        // Predicated region
        $region137: #{tpu_custom_call.1} parent=87 // pred_check
          %p1986 = pneg %p422
        $region138: #{tpu_custom_call.1} parent=87 // pred_check_branch
          %1988 = sbr.rel (%p1986) target = $region140
        $region139: #{tpu_custom_call.1} parent=87 // pred_region
          %1989 = dma.done [#allocation11], 128
        $region140: #{tpu_custom_call.1} parent=87 // pred_fallthru
          _
      $region88: #{tpu_custom_call.1} parent=5 // pred_fallthru
        _
      %p1990 = scmp.le.s32.totalorder 2, %s25
      // Predicated region
      $region141: #{tpu_custom_call.1} parent=5 // pred_check
        %p1991 = pneg %p1990
      $region142: #{tpu_custom_call.1} parent=5 // pred_check_branch
        %1993 = sbr.rel (%p1991) target = $region144
      $region143: #{tpu_custom_call.1} parent=5 // pred_region
        %s1994 = ssub.s32 %s25, 2
      $region144: #{tpu_custom_call.1} parent=5 // pred_fallthru
        _
    $region6: #{tpu_custom_call.1} parent=1 // loop_footer
      %s29 = sadd.s32 1, %s25
    $region7: #{tpu_custom_call.1} parent=1 // loop_footer_branch
      %24 = sbr.rel target = $region3
    $region8: #{tpu_custom_call.1} parent=1 // loop_exit
      _
    %1995 = vsyncpa [#allocation11], 1
    %s1996 = scalar_lea.sflag [#allocation11], 1
    %1997 = vsyncpa %s1996, 1
    %1998 = vsyncpa [#allocation12], 1
    %s1999 = scalar_lea.sflag [#allocation12], 1
    %2000 = vsyncpa %s1999, 1

</llo_original>
